<compile_context>
chip_gen: v7x
topology: tpu7x:2x2x1
jax: 0.10.0
libtpu: 0.0.40
codegen_flags: <defaults>
</compile_context>

<pallas_src>
import functools

import jax
import jax.numpy as jnp
from jax.experimental import pallas as pl
from jax.experimental.pallas import tpu as pltpu


def _mxu_dtype(ref):
    """bf16 MXU operands when activations are bf16 (v6e/v7x), else f32."""
    return jnp.bfloat16 if ref.dtype == jnp.bfloat16 else jnp.float32


# ---------------------------------------------------------------------------
# Kernel 1: fused LayerNorm (over channels) + pointwise linear (1x1 conv),
#           both branches in one pallas_call (branch axis selects weights).
# ---------------------------------------------------------------------------
def _ln_linear_kernel(x_ref, lw_ref, lb_ref, w_ref, b_ref, o_ref):
    x = x_ref[0].astype(jnp.float32)                       # (TM, Cin)
    mu = jnp.mean(x, axis=1, keepdims=True)
    xc = x - mu
    var = jnp.mean(xc * xc, axis=1, keepdims=True)
    xn = xc * jax.lax.rsqrt(var + 1e-5)
    xn = xn * lw_ref[...] + lb_ref[...]                    # (1, Cin) broadcast
    mxu = _mxu_dtype(x_ref)
    # y = xn @ W^T with W kept in PyTorch (Cout, Cin) layout (trans_b on MXU).
    y = jax.lax.dot_general(xn.astype(mxu), w_ref[0].astype(mxu),
                            (((1,), (1,)), ((), ())),
                            preferred_element_type=jnp.float32)
    y = y + b_ref[0]                                       # (1, Cout)
    o_ref[0] = y.astype(o_ref.dtype)


def _pick_row_tile(n):
    # 512-row tiles already reach ~85% of HBM roofline; larger tiles only add
    # VMEM pressure (esp. on v5e's 16 MiB default scoped VMEM).
    for cand in (512, 256, 128, 64, 32, 16, 8):
        if n % cand == 0:
            return cand
    return n


def pallas_ln_dual_linear(xs, ln_w, ln_b, ws, bs):
    """Fused LayerNorm + 1x1 conv for both branches in one pallas_call.

    xs: (2, N, Cin)  -- [0] = q branch tokens (x_r), [1] = kv branch (x_v)
    ws: (2, Cout, Cin) PyTorch layout; bs: (2, 1, Cout)
    returns (2, N, Cout)
    """
    _, N, Cin = xs.shape
    Cout = ws.shape[1]
    tm = _pick_row_tile(N)
    return pl.pallas_call(
        _ln_linear_kernel,
        out_shape=jax.ShapeDtypeStruct((2, N, Cout), xs.dtype),
        grid=(2, N // tm),
        in_specs=[
            pl.BlockSpec((1, tm, Cin), lambda br, i: (br, i, 0)),
            pl.BlockSpec((1, Cin), lambda br, i: (0, 0)),
            pl.BlockSpec((1, Cin), lambda br, i: (0, 0)),
            pl.BlockSpec((1, Cout, Cin), lambda br, i: (br, 0, 0)),
            pl.BlockSpec((1, 1, Cout), lambda br, i: (br, 0, 0)),
        ],
        out_specs=pl.BlockSpec((1, tm, Cout), lambda br, i: (br, i, 0)),
        compiler_params=pltpu.CompilerParams(
            dimension_semantics=("parallel", "parallel")),
    )(xs, ln_w.reshape(1, Cin), ln_b.reshape(1, Cin), ws, bs)


# ---------------------------------------------------------------------------
# Kernel 2: fused depthwise 3x3 conv for both branches + gated GELU,
#           channel-major output (layout change folded into the kernel).
# ---------------------------------------------------------------------------
def _dw_gate_kernel(qin_ref, kvin_ref, w_ref, b_ref, o_ref, xp_ref):
    # qin_ref / kvin_ref: (1, H, W, 2c)  pre-dwconv activations per branch
    # w_ref: (9, 1, 4c) taps [qdw | kvdw], t = dy*3 + dx;  b_ref: (1, 4c)
    # o_ref: (1, 3c, H*W) channel-major;  xp_ref scratch: (H+2, W+2, 4c) fp32
    H, W, C2 = qin_ref.shape[1], qin_ref.shape[2], qin_ref.shape[3]
    C4 = 2 * C2
    c = C2 // 2

    # Zero only the 1-pixel halo (not the whole scratch), then copy interiors.
    zr = jnp.zeros((1, W + 2, C4), xp_ref.dtype)
    zc = jnp.zeros((H + 2, 1, C4), xp_ref.dtype)
    xp_ref[0:1, :, :] = zr
    xp_ref[H + 1:H + 2, :, :] = zr
    xp_ref[:, 0:1, :] = zc
    xp_ref[:, W + 1:W + 2, :] = zc
    xp_ref[1:H + 1, 1:W + 1, 0:C2] = qin_ref[0].astype(xp_ref.dtype)
    xp_ref[1:H + 1, 1:W + 1, C2:C4] = kvin_ref[0].astype(xp_ref.dtype)

    acc = jnp.zeros((H, W, C4), jnp.float32)
    for t in range(9):
        dy, dx = t // 3, t % 3
        acc = acc + xp_ref[dy:dy + H, dx:dx + W, :] * w_ref[t]
    res = (acc + b_ref[...]).reshape(H * W, C4)            # (L, 4c) token-major

    # Token-major -> channel-major on the otherwise-idle XLU so the store below
    # is lane-dense (L >= 128 lanes) and K3 needs no XLA transpose.
    res_t = jnp.transpose(res)                             # (4c, L)
    x1 = res_t[0:c, :]
    x2 = res_t[c:C2, :]
    gated = jax.nn.gelu(x1) * x2                           # (c, L)
    o_ref[0] = jnp.concatenate([gated, res_t[C2:, :]],
                               axis=0).astype(o_ref.dtype)


def pallas_dwconv_gate(y4, taps, bias):
    """Fused depthwise-3x3 for both branches + gated GELU for the q branch.

    y4:   (2B, H, W, 2c)  rows [0:B] = q branch, [B:2B] = kv branch
    taps: (9, 1, 4c)      [qdw | kvdw];  bias: (4c,)
    returns (B, 3c, H*W) channel-major: rows [0:c]=gated q, [c:2c]=k, [2c:3c]=v
    """
    B2, H, W, C2 = y4.shape
    B = B2 // 2
    C4 = 2 * C2
    c = C2 // 2
    L = H * W
    return pl.pallas_call(
        _dw_gate_kernel,
        out_shape=jax.ShapeDtypeStruct((B, 3 * c, L), y4.dtype),
        grid=(B,),
        in_specs=[
            pl.BlockSpec((1, H, W, C2), lambda i: (i, 0, 0, 0)),
            pl.BlockSpec((1, H, W, C2), lambda i: (i + B, 0, 0, 0)),
            pl.BlockSpec((9, 1, C4), lambda i: (0, 0, 0)),
            pl.BlockSpec((1, C4), lambda i: (0, 0)),
        ],
        out_specs=pl.BlockSpec((1, 3 * c, L), lambda i: (i, 0, 0)),
        scratch_shapes=[pltpu.VMEM((H + 2, W + 2, C4), jnp.float32)],
        compiler_params=pltpu.CompilerParams(dimension_semantics=("parallel",)),
    )(y4, y4, taps, bias.reshape(1, C4))


# ---------------------------------------------------------------------------
# Kernel 3: channel attention (full-c masked gram, one MXU pass) + project_out.
# ---------------------------------------------------------------------------
def _attn_proj_kernel(x_ref, t_ref, wo_ref, bo_ref, o_ref, *, num_heads):
    # x_ref: (1, 3c, L) channel-major [q | k | v]; t_ref: (c, 1) per-channel temp
    # wo_ref: (c, c) PyTorch (Cout, Cin); bo_ref: (c, 1); o_ref: (1, c, L)==NCHW
    C3, L = x_ref.shape[1], x_ref.shape[2]
    c = C3 // 3
    ch = c // num_heads
    x = x_ref[0].astype(jnp.float32)
    q = x[0:c, :]
    k = x[c:2 * c, :]
    v = x[2 * c:, :]

    # L2-normalize q, k over the spatial (lane) axis.
    qn = q * jax.lax.rsqrt(jnp.sum(q * q, axis=-1, keepdims=True) + 1e-12)
    kn = k * jax.lax.rsqrt(jnp.sum(k * k, axis=-1, keepdims=True) + 1e-12)

    mxu = _mxu_dtype(x_ref)
    # One full (c, c) gram (trans_b on MXU) with a block-diagonal head mask:
    # equivalent to per-head attention but with far better MXU utilization
    # when ch << MXU width.
    s = jax.lax.dot_general(qn.astype(mxu), kn.astype(mxu),
                            (((1,), (1,)), ((), ())),
                            preferred_element_type=jnp.float32)       # (c, c)
    s = s * t_ref[...]                                     # per-head temperature
    row_h = jax.lax.broadcasted_iota(jnp.int32, (c, c), 0) // ch
    col_h = jax.lax.broadcasted_iota(jnp.int32, (c, c), 1) // ch
    s = jnp.where(row_h == col_h, s, -1e30)
    s = s - jnp.max(s, axis=-1, keepdims=True)
    p = jnp.exp(s)
    inv = pl.reciprocal(jnp.sum(p, axis=-1, keepdims=True), approx=True)

    out = jnp.dot(p.astype(mxu), v.astype(mxu),
                  preferred_element_type=jnp.float32)                 # (c, L)
    out = out * inv                                        # fold 1/sum after P@V

    y = jnp.dot(wo_ref[...].astype(mxu), out.astype(mxu),
                preferred_element_type=jnp.float32) + bo_ref[...]
    o_ref[0] = y.astype(o_ref.dtype)


def pallas_attention(qkv_cm, temp_c, wo, bo, num_heads):
    """qkv_cm: (B, 3c, L) channel-major; returns (B, c, L) (== NCHW layout)."""
    B, C3, L = qkv_cm.shape
    c = C3 // 3
    return pl.pallas_call(
        functools.partial(_attn_proj_kernel, num_heads=num_heads),
        out_shape=jax.ShapeDtypeStruct((B, c, L), qkv_cm.dtype),
        grid=(B,),
        in_specs=[
            pl.BlockSpec((1, C3, L), lambda i: (i, 0, 0)),
            pl.BlockSpec((c, 1), lambda i: (0, 0)),
            pl.BlockSpec((c, c), lambda i: (0, 0)),
            pl.BlockSpec((c, 1), lambda i: (0, 0)),
        ],
        out_specs=pl.BlockSpec((1, c, L), lambda i: (i, 0, 0)),
        compiler_params=pltpu.CompilerParams(dimension_semantics=("parallel",)),
    )(qkv_cm, temp_c, wo, bo.reshape(c, 1))


# ---------------------------------------------------------------------------
# Parameter init (deterministic, PyTorch-layout shapes)
# ---------------------------------------------------------------------------
def init_params(key, dim, num_heads):
    ks = jax.random.split(key, 13)

    def rnd(k, shape, scale=0.1):
        return jax.random.normal(k, shape, jnp.float32) * scale

    return dict(
        ln_w=1.0 + rnd(ks[0], (dim,), 0.05),          # norm1 (WithBias)
        ln_b=rnd(ks[1], (dim,), 0.05),
        pin_w=rnd(ks[2], (2 * dim, dim)),             # q_dwconv.project_in (Cout,Cin)
        pin_b=rnd(ks[3], (2 * dim,), 0.02),
        qdw_w=rnd(ks[4], (2 * dim, 1, 3, 3)),         # q_dwconv.dwconv (depthwise)
        qdw_b=rnd(ks[5], (2 * dim,), 0.02),
        kv_w=rnd(ks[6], (2 * dim, dim)),              # kv 1x1 conv
        kv_b=rnd(ks[7], (2 * dim,), 0.02),
        kvdw_w=rnd(ks[8], (2 * dim, 1, 3, 3)),        # kv_dwconv (depthwise)
        kvdw_b=rnd(ks[9], (2 * dim,), 0.02),
        po_w=rnd(ks[10], (dim, dim)),                 # project_out
        po_b=rnd(ks[11], (dim,), 0.02),
        temperature=1.0 + rnd(ks[12], (num_heads, 1, 1), 0.1),
    )


def _taps(w_dw):
    """(C, 1, 3, 3) depthwise weight -> (9, 1, C), tap index t = dy*3 + dx."""
    C = w_dw.shape[0]
    return jnp.transpose(w_dw[:, 0], (1, 2, 0)).reshape(9, C)[:, None, :]


# ---------------------------------------------------------------------------
# Full forward (glue in plain JAX, compute in Pallas)
# ---------------------------------------------------------------------------
def gated_cross_att(x_v, x_r, params, num_heads):
    b, c, h, w = x_v.shape
    L = h * w

    # The only XLA layout op in the pipeline: NCHW -> tokens for both branches
    # at once (stacked so one fused K1 call serves the q and kv branches).
    x_pair = jnp.stack([x_r, x_v], axis=0)                           # (2, b, c, h, w)
    xs = jnp.transpose(x_pair, (0, 1, 3, 4, 2)).reshape(2, b * L, c)

    ws = jnp.stack([params["pin_w"], params["kv_w"]], axis=0)        # (2, 2c, c)
    bs = jnp.stack([params["pin_b"], params["kv_b"]],
                   axis=0).reshape(2, 1, 2 * c)

    ys = pallas_ln_dual_linear(xs, params["ln_w"], params["ln_b"], ws, bs)
    y4 = ys.reshape(2 * b, h, w, 2 * c)                              # free reshape

    taps = jnp.concatenate([_taps(params["qdw_w"]), _taps(params["kvdw_w"])],
                           axis=-1)                                  # (9, 1, 4c)
    bias = jnp.concatenate([params["qdw_b"], params["kvdw_b"]])      # (4c,)

    qkv_cm = pallas_dwconv_gate(y4, taps, bias)                      # (b, 3c, L)

    temp_c = jnp.repeat(params["temperature"].reshape(num_heads),
                        c // num_heads).reshape(c, 1)
    out_cm = pallas_attention(qkv_cm, temp_c, params["po_w"], params["po_b"],
                              num_heads)                             # (b, c, L)
    return out_cm.reshape(b, c, h, w)                                # NCHW


# ---------------------------------------------------------------------------
# Pure-JAX reference for validation
# ---------------------------------------------------------------------------
def reference_forward(x_v, x_r, params, num_heads):
    b, c, h, w = x_v.shape
    ln_w, ln_b = params["ln_w"], params["ln_b"]

    def layer_norm(x):  # NCHW, per-pixel LayerNorm over channels (WithBias)
        xt = jnp.transpose(x, (0, 2, 3, 1))
        mu = jnp.mean(xt, -1, keepdims=True)
        var = jnp.mean((xt - mu) ** 2, -1, keepdims=True)
        xn = (xt - mu) / jnp.sqrt(var + 1e-5) * ln_w + ln_b
        return jnp.transpose(xn, (0, 3, 1, 2))

    def conv1x1(x, W, bias):
        return jnp.einsum('bihw,oi->bohw', x, W) + bias[None, :, None, None]

    def dwconv3(x, W, bias):  # W: (C, 1, 3, 3)
        xp = jnp.pad(x, ((0, 0), (0, 0), (1, 1), (1, 1)))
        out = jnp.zeros_like(x)
        for dy in range(3):
            for dx in range(3):
                out = out + xp[:, :, dy:dy + h, dx:dx + w] * \
                    W[:, 0, dy, dx][None, :, None, None]
        return out + bias[None, :, None, None]

    nv, nr = layer_norm(x_v), layer_norm(x_r)

    t = dwconv3(conv1x1(nr, params["pin_w"], params["pin_b"]),
                params["qdw_w"], params["qdw_b"])
    q = jax.nn.gelu(t[:, :c]) * t[:, c:]

    kv = dwconv3(conv1x1(nv, params["kv_w"], params["kv_b"]),
                 params["kvdw_w"], params["kvdw_b"])
    k, v = kv[:, :c], kv[:, c:]

    ch = c // num_heads
    heads = lambda x: x.reshape(b, num_heads, ch, h * w)
    qh, kh, vh = heads(q), heads(k), heads(v)
    qn = qh * jax.lax.rsqrt(jnp.sum(qh * qh, -1, keepdims=True) + 1e-12)
    kn = kh * jax.lax.rsqrt(jnp.sum(kh * kh, -1, keepdims=True) + 1e-12)
    attn = jnp.einsum('bncl,bndl->bncd', qn, kn) * params["temperature"][None]
    attn = jax.nn.softmax(attn, -1)
    out = jnp.einsum('bncd,bndl->bncl', attn, vh).reshape(b, c, h, w)
    return conv1x1(out, params["po_w"], params["po_b"])


if __name__ == "__main__":
    dim, num_heads, b, h, w = 32, 4, 2, 16, 16
    key = jax.random.PRNGKey(0)
    kxv, kxr, kp = jax.random.split(key, 3)
    xv = jax.random.normal(kxv, (b, dim, h, w), jnp.float32)
    xr = jax.random.normal(kxr, (b, dim, h, w), jnp.float32)
    params = init_params(kp, dim, num_heads)

    out = gated_cross_att(xv, xr, params, num_heads)
    out = jax.block_until_ready(out)

    ref = reference_forward(xv, xr, params, num_heads)
    assert out.shape == (b, dim, h, w), out.shape
    assert bool(jnp.all(jnp.isfinite(out)))
    err = float(jnp.max(jnp.abs(out - ref)))
    assert bool(jnp.allclose(out, ref, rtol=2e-2, atol=2e-3)), \
        f"mismatch vs reference: max|diff|={err:.3e}"
    print("KERNEL_OK")
</pallas_src>

<mosaic_0001>
module attributes {stable_mosaic.version = 11 : i64} {
  func.func @_ln_linear_kernel(%arg0: i32, %arg1: i32, %arg2: memref<1x512x32xf32, #tpu.memory_space<vmem>>, %arg3: memref<1x32xf32, #tpu.memory_space<vmem>>, %arg4: memref<1x32xf32, #tpu.memory_space<vmem>>, %arg5: memref<1x64x32xf32, #tpu.memory_space<vmem>>, %arg6: memref<1x1x64xf32, #tpu.memory_space<vmem>>, %arg7: memref<1x512x64xf32, #tpu.memory_space<vmem>>) attributes {dimension_semantics = [#tpu.dimension_semantics<parallel>, #tpu.dimension_semantics<parallel>], iteration_bounds = array<i64: 2, 1>, scalar_prefetch = 0 : i64, scratch_operands = 0 : i64, tpu.core_type = #tpu.core_type<tc>, window_params = [{transform_indices = @transform_0, window_bounds = array<i64: 1, 512, 32>}, {pipeline_mode = #tpu.pipeline_mode<synchronous>, transform_indices = @transform_1, window_bounds = array<i64: 1, 32>}, {pipeline_mode = #tpu.pipeline_mode<synchronous>, transform_indices = @transform_2, window_bounds = array<i64: 1, 32>}, {transform_indices = @transform_3, window_bounds = array<i64: 1, 64, 32>}, {transform_indices = @transform_4, window_bounds = array<i64: 1, 1, 64>}, {transform_indices = @transform_5, window_bounds = array<i64: 1, 512, 64>}]} {
    %c0 = arith.constant 0 : index
    %c0_0 = arith.constant 0 : index
    %c0_1 = arith.constant 0 : index
    %0 = vector.load %arg2[%c0, %c0_0, %c0_1] : memref<1x512x32xf32, #tpu.memory_space<vmem>>, vector<1x512x32xf32>
    %1 = vector.shape_cast %0 : vector<1x512x32xf32> to vector<512x32xf32>
    %cst = arith.constant dense<0.000000e+00> : vector<512xf32>
    %2 = vector.multi_reduction <add>, %1, %cst [1] : vector<512x32xf32> to vector<512xf32>
    %3 = vector.shape_cast %2 : vector<512xf32> to vector<512x1xf32>
    %cst_2 = arith.constant 3.200000e+01 : f32
    %4 = vector.broadcast %cst_2 : f32 to vector<512x1xf32>
    %5 = arith.divf %3, %4 : vector<512x1xf32>
    %6 = vector.broadcast %5 : vector<512x1xf32> to vector<512x32xf32>
    %7 = arith.subf %1, %6 : vector<512x32xf32>
    %8 = arith.mulf %7, %7 : vector<512x32xf32>
    %cst_3 = arith.constant dense<0.000000e+00> : vector<512xf32>
    %9 = vector.multi_reduction <add>, %8, %cst_3 [1] : vector<512x32xf32> to vector<512xf32>
    %10 = vector.shape_cast %9 : vector<512xf32> to vector<512x1xf32>
    %cst_4 = arith.constant 3.200000e+01 : f32
    %11 = vector.broadcast %cst_4 : f32 to vector<512x1xf32>
    %12 = arith.divf %10, %11 : vector<512x1xf32>
    %cst_5 = arith.constant 9.99999974E-6 : f32
    %13 = vector.broadcast %cst_5 : f32 to vector<512x1xf32>
    %14 = arith.addf %12, %13 : vector<512x1xf32>
    %15 = math.rsqrt %14 : vector<512x1xf32>
    %16 = vector.broadcast %15 : vector<512x1xf32> to vector<512x32xf32>
    %17 = arith.mulf %7, %16 : vector<512x32xf32>
    %c0_6 = arith.constant 0 : index
    %c0_7 = arith.constant 0 : index
    %18 = vector.load %arg3[%c0_6, %c0_7] : memref<1x32xf32, #tpu.memory_space<vmem>>, vector<1x32xf32>
    %19 = vector.broadcast %18 : vector<1x32xf32> to vector<512x32xf32>
    %20 = arith.mulf %17, %19 : vector<512x32xf32>
    %c0_8 = arith.constant 0 : index
    %c0_9 = arith.constant 0 : index
    %21 = vector.load %arg4[%c0_8, %c0_9] : memref<1x32xf32, #tpu.memory_space<vmem>>, vector<1x32xf32>
    %22 = vector.broadcast %21 : vector<1x32xf32> to vector<512x32xf32>
    %23 = arith.addf %20, %22 : vector<512x32xf32>
    %c0_10 = arith.constant 0 : index
    %c0_11 = arith.constant 0 : index
    %c0_12 = arith.constant 0 : index
    %24 = vector.load %arg5[%c0_10, %c0_11, %c0_12] : memref<1x64x32xf32, #tpu.memory_space<vmem>>, vector<1x64x32xf32>
    %25 = vector.shape_cast %24 : vector<1x64x32xf32> to vector<64x32xf32>
    %cst_13 = arith.constant dense<0.000000e+00> : vector<512x64xf32>
    %26 = tpu.matmul %23, %25, %cst_13 {dimension_numbers = #tpu.dot_dimension_numbers<[1], [1], [0], [0], [0, 0, 1, 0], [], []>} : vector<512x32xf32>, vector<64x32xf32>, vector<512x64xf32> -> vector<512x64xf32>
    %c0_14 = arith.constant 0 : index
    %c0_15 = arith.constant 0 : index
    %c0_16 = arith.constant 0 : index
    %27 = vector.load %arg6[%c0_14, %c0_15, %c0_16] : memref<1x1x64xf32, #tpu.memory_space<vmem>>, vector<1x1x64xf32>
    %28 = vector.shape_cast %27 : vector<1x1x64xf32> to vector<1x64xf32>
    %29 = vector.broadcast %28 : vector<1x64xf32> to vector<512x64xf32>
    %30 = arith.addf %26, %29 : vector<512x64xf32>
    %c0_17 = arith.constant 0 : index
    %c0_18 = arith.constant 0 : index
    %c0_19 = arith.constant 0 : index
    %31 = vector.load %arg7[%c0_17, %c0_18, %c0_19] : memref<1x512x64xf32, #tpu.memory_space<vmem>>, vector<1x512x64xf32>
    %32 = vector.shape_cast %31 : vector<1x512x64xf32> to vector<512x64xf32>
    %33 = vector.shape_cast %30 : vector<512x64xf32> to vector<1x512x64xf32>
    tpu.vector_store %arg7[%c0_17, %c0_18, %c0_19], %33 {strides = array<i32>} : memref<1x512x64xf32, #tpu.memory_space<vmem>>, vector<1x512x64xf32>,
    return
  }
  func.func @transform_0(%arg0: i32, %arg1: i32) -> (i32, i32, i32) {
    %c0_i32 = arith.constant 0 : i32
    %c0_i32_0 = arith.constant 0 : i32
    return %arg0, %arg1, %c0_i32 : i32, i32, i32
  }
  func.func @transform_1(%arg0: i32, %arg1: i32) -> (i32, i32) {
    %c0_i32 = arith.constant 0 : i32
    %c0_i32_0 = arith.constant 0 : i32
    %c0_i32_1 = arith.constant 0 : i32
    return %c0_i32, %c0_i32_0 : i32, i32
  }
  func.func @transform_2(%arg0: i32, %arg1: i32) -> (i32, i32) {
    %c0_i32 = arith.constant 0 : i32
    %c0_i32_0 = arith.constant 0 : i32
    %c0_i32_1 = arith.constant 0 : i32
    return %c0_i32, %c0_i32_0 : i32, i32
  }
  func.func @transform_3(%arg0: i32, %arg1: i32) -> (i32, i32, i32) {
    %c0_i32 = arith.constant 0 : i32
    %c0_i32_0 = arith.constant 0 : i32
    %c0_i32_1 = arith.constant 0 : i32
    return %arg0, %c0_i32, %c0_i32_0 : i32, i32, i32
  }
  func.func @transform_4(%arg0: i32, %arg1: i32) -> (i32, i32, i32) {
    %c0_i32 = arith.constant 0 : i32
    %c0_i32_0 = arith.constant 0 : i32
    %c0_i32_1 = arith.constant 0 : i32
    return %arg0, %c0_i32, %c0_i32_0 : i32, i32, i32
  }
  func.func @transform_5(%arg0: i32, %arg1: i32) -> (i32, i32, i32) {
    %c0_i32 = arith.constant 0 : i32
    %c0_i32_0 = arith.constant 0 : i32
    return %arg0, %arg1, %c0_i32 : i32, i32, i32
  }
}

</mosaic_0001>

<llo_original>
// kernel: tpu_custom_call.1
$region0: #{tpu_custom_call.1}
  #allocation0 [shape = 'u32[]', space=smem, size = 0x4, offset = 0x4, fixed_abs, tag = 'smem constant byte address 0x4 - core index']
  #allocation1 [shape = 'u32[144,128]{1,0:T(1,128)}', space=vmem, size = 0x12000, scoped, tag = 'internal scratch']
  %s0 = inlined_call_operand.vmem [shape: f32[2,512,32], index: 0, kind: input, shape index: {}]
  %s1 = inlined_call_operand.vmem [shape: f32[1,32], index: 1, kind: input, shape index: {}]
  %s2 = inlined_call_operand.vmem [shape: f32[1,32], index: 2, kind: input, shape index: {}]
  %s3 = inlined_call_operand.vmem [shape: f32[2,64,32], index: 3, kind: input, shape index: {}]
  %s4 = inlined_call_operand.vmem [shape: f32[2,1,64], index: 4, kind: input, shape index: {}]
  %s5 = inlined_call_operand.vmem [shape: f32[2,512,64], index: 5, kind: output, shape index: {}]
  %s6 = sld [smem:[#allocation0]]
  $region53: #{tpu_custom_call.1} parent=0
    _
  %s8 = ssub.s32 1, %s6
  %s9 = scalar_select 0, %s8, %s6
  loop: start=0, step=1, limit=4
  $region2: #{tpu_custom_call.1} parent=0 // loop_pre_header
    _
  $region3: #{tpu_custom_call.1} parent=0 // loop_header
    %s11 = sphi 0, %s15
    %p12 = scmp.ge.s32.totalorder %s11, 4
    %s18 = sphi 0, %s30
    %s19 = sphi 0, %s26
    %s20 = sphi 0, %s18
    %s21 = sphi 0, %s19
    %s22 = sphi 0, %s20
    %s23 = sphi 0, %s21
    %s35 = sphi 0, %s37
    %s38 = sphi 0, %s35
    %s39 = sphi 0, %s38
    %s55 = sphi 0, %s39
    %s59 = sphi 0, %s59
    %s61 = sphi 0, %s59
    %s62 = sphi 0, %s61
    %s76 = sphi 0, %s62
    %s80 = sphi 0, %s80
    %s82 = sphi 0, %s80
    %s83 = sphi 0, %s82
    %s97 = sphi 0, %s83
    %s103 = sphi 0, %s105
    %s106 = sphi 0, %s103
    %s107 = sphi 0, %s106
    %s123 = sphi 0, %s107
    %s129 = sphi 0, %s131
    %s132 = sphi 0, %s129
    %s133 = sphi 0, %s132
    %s149 = sphi 0, %s133
    %s157 = sphi 0, %s159
    %s160 = sphi 0, %s157
    %s161 = sphi 0, %s160
    %s177 = sphi 0, %s161
  $region4: #{tpu_custom_call.1} parent=0 // loop_header_branch
    %14 = sbr.rel (%p12) target = $region8
  $region5: #{tpu_custom_call.1} parent=0 // loop_body
    %s16 = ssub.s32 %s11, 1
    %s17 = ssub.s32 %s11, 2
    %s24 = sadd.s32 1, %s19
    %p25 = scmp.ge.s32.totalorder %s24, 1
    %s26 = scalar_select %p25, 0, %s24
    %s27 = sadd.s32 1, %s18
    %s28 = scalar_select %p25, %s27, %s18
    %p29 = scmp.ge.s32.totalorder %s28, 2
    %s30 = scalar_select %p29, 0, %s28
    %s31 = ssub.s32 %s18, %s30
    %s32 = ssub.s32 %s19, %s26
    %s33 = sor.u32 %s31, %s32
    %p34 = scmp.eq.s32.totalorder %s33, 0
    %s36 = sadd.s32 %s35, 1
    %s37 = scalar_select %p34, %s35, %s36
    %p40 = pneg %p34
    %p41 = scmp.eq.s32.totalorder %s11, 1
    %p42 = por %p40, %p41
    %p43 = scmp.ne.s32.totalorder %s35, %s38
    %p44 = scmp.eq.s32.totalorder %s11, 0
    %p45 = por %p43, %p44
    %p46 = scmp.ne.s32.totalorder %s35, %s38
    %p47 = scmp.eq.s32.totalorder %s16, 1
    %p48 = por %p46, %p47
    %p49 = scmp.ne.s32.totalorder %s38, %s39
    %p50 = scmp.eq.s32.totalorder %s16, 0
    %p51 = por %p49, %p50
    %p52 = scmp.ne.s32.totalorder %s38, %s39
    %p53 = scmp.eq.s32.totalorder %s17, 1
    %p54 = por %p52, %p53
    %p56 = scmp.ne.s32.totalorder %s39, %s55
    %p57 = scmp.eq.s32.totalorder %s17, 0
    %p58 = por %p56, %p57
    %s60 = sadd.s32 %s59, 1
    %p63 = scmp.eq.s32.totalorder %s11, 1
    %p64 = scmp.ne.s32.totalorder %s59, %s61
    %p65 = scmp.eq.s32.totalorder %s11, 0
    %p66 = por %p64, %p65
    %p67 = scmp.ne.s32.totalorder %s59, %s61
    %p68 = scmp.eq.s32.totalorder %s16, 1
    %p69 = por %p67, %p68
    %p70 = scmp.ne.s32.totalorder %s61, %s62
    %p71 = scmp.eq.s32.totalorder %s16, 0
    %p72 = por %p70, %p71
    %p73 = scmp.ne.s32.totalorder %s61, %s62
    %p74 = scmp.eq.s32.totalorder %s17, 1
    %p75 = por %p73, %p74
    %p77 = scmp.ne.s32.totalorder %s62, %s76
    %p78 = scmp.eq.s32.totalorder %s17, 0
    %p79 = por %p77, %p78
    %s81 = sadd.s32 %s80, 1
    %p84 = scmp.eq.s32.totalorder %s11, 1
    %p85 = scmp.ne.s32.totalorder %s80, %s82
    %p86 = scmp.eq.s32.totalorder %s11, 0
    %p87 = por %p85, %p86
    %p88 = scmp.ne.s32.totalorder %s80, %s82
    %p89 = scmp.eq.s32.totalorder %s16, 1
    %p90 = por %p88, %p89
    %p91 = scmp.ne.s32.totalorder %s82, %s83
    %p92 = scmp.eq.s32.totalorder %s16, 0
    %p93 = por %p91, %p92
    %p94 = scmp.ne.s32.totalorder %s82, %s83
    %p95 = scmp.eq.s32.totalorder %s17, 1
    %p96 = por %p94, %p95
    %p98 = scmp.ne.s32.totalorder %s83, %s97
    %p99 = scmp.eq.s32.totalorder %s17, 0
    %p100 = por %p98, %p99
    %s101 = ssub.s32 %s18, %s30
    %p102 = scmp.eq.s32.totalorder %s101, 0
    %s104 = sadd.s32 %s103, 1
    %s105 = scalar_select %p102, %s103, %s104
    %p108 = pneg %p102
    %p109 = scmp.eq.s32.totalorder %s11, 1
    %p110 = por %p108, %p109
    %p111 = scmp.ne.s32.totalorder %s103, %s106
    %p112 = scmp.eq.s32.totalorder %s11, 0
    %p113 = por %p111, %p112
    %p114 = scmp.ne.s32.totalorder %s103, %s106
    %p115 = scmp.eq.s32.totalorder %s16, 1
    %p116 = por %p114, %p115
    %p117 = scmp.ne.s32.totalorder %s106, %s107
    %p118 = scmp.eq.s32.totalorder %s16, 0
    %p119 = por %p117, %p118
    %p120 = scmp.ne.s32.totalorder %s106, %s107
    %p121 = scmp.eq.s32.totalorder %s17, 1
    %p122 = por %p120, %p121
    %p124 = scmp.ne.s32.totalorder %s107, %s123
    %p125 = scmp.eq.s32.totalorder %s17, 0
    %p126 = por %p124, %p125
    %s127 = ssub.s32 %s18, %s30
    %p128 = scmp.eq.s32.totalorder %s127, 0
    %s130 = sadd.s32 %s129, 1
    %s131 = scalar_select %p128, %s129, %s130
    %p134 = pneg %p128
    %p135 = scmp.eq.s32.totalorder %s11, 1
    %p136 = por %p134, %p135
    %p137 = scmp.ne.s32.totalorder %s129, %s132
    %p138 = scmp.eq.s32.totalorder %s11, 0
    %p139 = por %p137, %p138
    %p140 = scmp.ne.s32.totalorder %s129, %s132
    %p141 = scmp.eq.s32.totalorder %s16, 1
    %p142 = por %p140, %p141
    %p143 = scmp.ne.s32.totalorder %s132, %s133
    %p144 = scmp.eq.s32.totalorder %s16, 0
    %p145 = por %p143, %p144
    %p146 = scmp.ne.s32.totalorder %s132, %s133
    %p147 = scmp.eq.s32.totalorder %s17, 1
    %p148 = por %p146, %p147
    %p150 = scmp.ne.s32.totalorder %s133, %s149
    %p151 = scmp.eq.s32.totalorder %s17, 0
    %p152 = por %p150, %p151
    %s153 = ssub.s32 %s18, %s30
    %s154 = ssub.s32 %s19, %s26
    %s155 = sor.u32 %s153, %s154
    %p156 = scmp.eq.s32.totalorder %s155, 0
    %s158 = sadd.s32 %s157, 1
    %s159 = scalar_select %p156, %s157, %s158
    %p162 = pneg %p156
    %p163 = scmp.eq.s32.totalorder %s11, 1
    %p164 = por %p162, %p163
    %p165 = scmp.ne.s32.totalorder %s157, %s160
    %p166 = scmp.eq.s32.totalorder %s11, 0
    %p167 = por %p165, %p166
    %p168 = scmp.ne.s32.totalorder %s157, %s160
    %p169 = scmp.eq.s32.totalorder %s16, 1
    %p170 = por %p168, %p169
    %p171 = scmp.ne.s32.totalorder %s160, %s161
    %p172 = scmp.eq.s32.totalorder %s16, 0
    %p173 = por %p171, %p172
    %p174 = scmp.ne.s32.totalorder %s160, %s161
    %p175 = scmp.eq.s32.totalorder %s17, 1
    %p176 = por %p174, %p175
    %p178 = scmp.ne.s32.totalorder %s161, %s177
    %p179 = scmp.eq.s32.totalorder %s17, 0
    %p180 = por %p178, %p179
    %p181 = scmp.le.s32.totalorder 1, %s11
    %p182 = scmp.lt.s32.totalorder %s11, 3
    %p183 = pnand %p181, %p182
    %p184 = pneg %p183
    // Predicated region
    $region9: #{tpu_custom_call.1} parent=5 // pred_check
      _
    $region10: #{tpu_custom_call.1} parent=5 // pred_check_branch
      %186 = sbr.rel (%p183) target = $region12
    $region11: #{tpu_custom_call.1} parent=5 // pred_region
      %s187 = ssub.s32 %s11, 1
      // Predicated region
      $region13: #{tpu_custom_call.1} parent=11 // pred_check
        %p188 = pneg %p72
      $region14: #{tpu_custom_call.1} parent=11 // pred_check_branch
        %190 = sbr.rel (%p188) target = $region16
      $region15: #{tpu_custom_call.1} parent=11 // pred_region
        _
      $region16: #{tpu_custom_call.1} parent=11 // pred_fallthru
        _
      // Predicated region
      $region17: #{tpu_custom_call.1} parent=11 // pred_check
        %p191 = pneg %p93
      $region18: #{tpu_custom_call.1} parent=11 // pred_check_branch
        %193 = sbr.rel (%p191) target = $region20
      $region19: #{tpu_custom_call.1} parent=11 // pred_region
        _
      $region20: #{tpu_custom_call.1} parent=11 // pred_fallthru
        _
    $region12: #{tpu_custom_call.1} parent=5 // pred_fallthru
      _
    %p194 = scmp.lt.s32.totalorder %s11, 2
    // Predicated region
    $region21: #{tpu_custom_call.1} parent=5 // pred_check
      %p195 = pneg %p194
    $region22: #{tpu_custom_call.1} parent=5 // pred_check_branch
      %197 = sbr.rel (%p195) target = $region24
    $region23: #{tpu_custom_call.1} parent=5 // pred_region
      // Predicated region
      $region25: #{tpu_custom_call.1} parent=23 // pred_check
        %p198 = pneg %p45
      $region26: #{tpu_custom_call.1} parent=23 // pred_check_branch
        %200 = sbr.rel (%p198) target = $region28
      $region27: #{tpu_custom_call.1} parent=23 // pred_region
        %s201 = smul.u32 64, %s19
        %p202 = scmp.lt.s32.totalorder %s18, 1
        %s203 = scalar_select %p202, %s18, 1
        %p204 = scmp.lt.s32.totalorder %s201, 63
        %s205 = scalar_select %p204, %s201, 63
        %s206 = smul.addr %s203, 64
        %s207 = sadd.s32 %s205, %s206
        %s208 = smul.addr %s207, 8
        %s209 = scalar_lea.vmem %s0, %s208
        %s210 = smul.u32 64, %s19
      $region28: #{tpu_custom_call.1} parent=23 // pred_fallthru
        _
      // Predicated region
      $region29: #{tpu_custom_call.1} parent=23 // pred_check
        %p211 = pneg %p113
      $region30: #{tpu_custom_call.1} parent=23 // pred_check_branch
        %213 = sbr.rel (%p211) target = $region32
      $region31: #{tpu_custom_call.1} parent=23 // pred_region
        %p214 = scmp.lt.s32.totalorder %s18, 1
        %s215 = scalar_select %p214, %s18, 1
        %s216 = smul.addr %s215, 8
        %s217 = smul.addr %s216, 8
        %s218 = scalar_lea.vmem %s3, %s217
      $region32: #{tpu_custom_call.1} parent=23 // pred_fallthru
        _
      // Predicated region
      $region33: #{tpu_custom_call.1} parent=23 // pred_check
        %p219 = pneg %p139
      $region34: #{tpu_custom_call.1} parent=23 // pred_check_branch
        %221 = sbr.rel (%p219) target = $region36
      $region35: #{tpu_custom_call.1} parent=23 // pred_region
        %p222 = scmp.lt.s32.totalorder %s18, 1
        %s223 = scalar_select %p222, %s18, 1
        %s224 = scalar_lea.vmem %s4, %s223
      $region36: #{tpu_custom_call.1} parent=23 // pred_fallthru
        _
    $region24: #{tpu_custom_call.1} parent=5 // pred_fallthru
      _
    %p225 = scmp.le.s32.totalorder 1, %s11
    %p226 = scmp.lt.s32.totalorder %s11, 3
    %p227 = pnand %p225, %p226
    %p228 = pneg %p227
    // Predicated region
    $region37: #{tpu_custom_call.1} parent=5 // pred_check
      _
    $region38: #{tpu_custom_call.1} parent=5 // pred_check_branch
      %230 = sbr.rel (%p227) target = $region40
    $region39: #{tpu_custom_call.1} parent=5 // pred_region
      %s231 = ssub.s32 %s11, 1
      %s232 = smul.u32 64, %s21
      %p233 = scmp.lt.s32.totalorder %s20, 1
      %s234 = scalar_select %p233, %s20, 1
      %p235 = scmp.lt.s32.totalorder %s232, 63
      %s236 = scalar_select %p235, %s232, 63
      %s237 = smul.addr %s234, 64
      %s238 = sadd.s32 %s236, %s237
      %s239 = smul.addr %s238, 8
      %s240 = scalar_lea.vmem %s0, %s239
      %p241 = pneg %p51
      %p242 = pneg %p48
      %p243 = pneg %p72
      %p244 = pneg %p69
      %p245 = pneg %p93
      %p246 = pneg %p90
      %p247 = scmp.lt.s32.totalorder %s20, 1
      %s248 = scalar_select %p247, %s20, 1
      %s249 = smul.addr %s248, 8
      %s250 = smul.addr %s249, 8
      %s251 = scalar_lea.vmem %s3, %s250
      %p252 = pneg %p119
      %p253 = pneg %p116
      %p254 = scmp.lt.s32.totalorder %s20, 1
      %s255 = scalar_select %p254, %s20, 1
      %s256 = scalar_lea.vmem %s4, %s255
      %p257 = pneg %p145
      %p258 = pneg %p142
      %p259 = pneg %p173
      %p260 = pneg %p170
      %s261 = smul.u32 64, %s21
      %p262 = scmp.lt.s32.totalorder %s20, 1
      %s263 = scalar_select %p262, %s20, 1
      %p264 = scmp.lt.s32.totalorder %s261, 63
      %s265 = scalar_select %p264, %s261, 63
      %s266 = smul.addr %s263, 64
      %s267 = sadd.s32 %s265, %s266
      %s268 = smul.addr %s267, 8
      %s269 = scalar_lea.vmem %s5, %s268
      %s270 = smul.u32 64, %s21
      %p271 = scmp.lt.s32.totalorder %s20, 1
      %s272 = scalar_select %p271, %s20, 1
      %p273 = scmp.lt.s32.totalorder %s270, 63
      %s274 = scalar_select %p273, %s270, 63
      %s275 = smul.addr %s272, 64
      %s276 = sadd.s32 %s274, %s275
      %s277 = smul.addr %s276, 8
      %s278 = scalar_lea.vmem %s0, %s277
      %s279 = smul.u32 64, %s21
      %p280 = scmp.lt.s32.totalorder %s20, 1
      %s281 = scalar_select %p280, %s20, 1
      %s282 = smul.addr %s281, 8
      %s283 = smul.addr %s282, 8
      %s284 = scalar_lea.vmem %s3, %s283
      %p285 = scmp.lt.s32.totalorder %s20, 1
      %s286 = scalar_select %p285, %s20, 1
      %s287 = scalar_lea.vmem %s4, %s286
      %s288 = smul.u32 64, %s21
      %p289 = scmp.lt.s32.totalorder %s20, 1
      %s290 = scalar_select %p289, %s20, 1
      %p291 = scmp.lt.s32.totalorder %s288, 63
      %s292 = scalar_select %p291, %s288, 63
      %s293 = smul.addr %s290, 64
      %s294 = sadd.s32 %s292, %s293
      %s295 = smul.addr %s294, 8
      %s296 = scalar_lea.vmem %s5, %s295
      %s297 = smul.u32 64, %s21
      %v298 = vld [vmem:[%s278] sm:$0xff]
      %v299 = vld [vmem:[%s278 + $0x8] sm:$0xff]
      %v300 = vld [vmem:[%s278 + $0x10] sm:$0xff]
      %v301 = vld [vmem:[%s278 + $0x18] sm:$0xff]
      %v302 = vld [vmem:[%s278 + $0x20] sm:$0xff]
      %v303 = vld [vmem:[%s278 + $0x28] sm:$0xff]
      %v304 = vld [vmem:[%s278 + $0x30] sm:$0xff]
      %v305 = vld [vmem:[%s278 + $0x38] sm:$0xff]
      %v306 = vld [vmem:[%s278 + $0x40] sm:$0xff]
      %v307 = vld [vmem:[%s278 + $0x48] sm:$0xff]
      %v308 = vld [vmem:[%s278 + $0x50] sm:$0xff]
      %v309 = vld [vmem:[%s278 + $0x58] sm:$0xff]
      %v310 = vld [vmem:[%s278 + $0x60] sm:$0xff]
      %v311 = vld [vmem:[%s278 + $0x68] sm:$0xff]
      %v312 = vld [vmem:[%s278 + $0x70] sm:$0xff]
      %v313 = vld [vmem:[%s278 + $0x78] sm:$0xff]
      %v314 = vld [vmem:[%s278 + $0x80] sm:$0xff]
      %v315 = vld [vmem:[%s278 + $0x88] sm:$0xff]
      %v316 = vld [vmem:[%s278 + $0x90] sm:$0xff]
      %v317 = vld [vmem:[%s278 + $0x98] sm:$0xff]
      %v318 = vld [vmem:[%s278 + $0xa0] sm:$0xff]
      %v319 = vld [vmem:[%s278 + $0xa8] sm:$0xff]
      %v320 = vld [vmem:[%s278 + $0xb0] sm:$0xff]
      %v321 = vld [vmem:[%s278 + $0xb8] sm:$0xff]
      %v322 = vld [vmem:[%s278 + $0xc0] sm:$0xff]
      %v323 = vld [vmem:[%s278 + $0xc8] sm:$0xff]
      %v324 = vld [vmem:[%s278 + $0xd0] sm:$0xff]
      %v325 = vld [vmem:[%s278 + $0xd8] sm:$0xff]
      %v326 = vld [vmem:[%s278 + $0xe0] sm:$0xff]
      %v327 = vld [vmem:[%s278 + $0xe8] sm:$0xff]
      %v328 = vld [vmem:[%s278 + $0xf0] sm:$0xff]
      %v329 = vld [vmem:[%s278 + $0xf8] sm:$0xff]
      %v330 = vld [vmem:[%s278 + $0x100] sm:$0xff]
      %v331 = vld [vmem:[%s278 + $0x108] sm:$0xff]
      %v332 = vld [vmem:[%s278 + $0x110] sm:$0xff]
      %v333 = vld [vmem:[%s278 + $0x118] sm:$0xff]
      %v334 = vld [vmem:[%s278 + $0x120] sm:$0xff]
      %v335 = vld [vmem:[%s278 + $0x128] sm:$0xff]
      %v336 = vld [vmem:[%s278 + $0x130] sm:$0xff]
      %v337 = vld [vmem:[%s278 + $0x138] sm:$0xff]
      %v338 = vld [vmem:[%s278 + $0x140] sm:$0xff]
      %v339 = vld [vmem:[%s278 + $0x148] sm:$0xff]
      %v340 = vld [vmem:[%s278 + $0x150] sm:$0xff]
      %v341 = vld [vmem:[%s278 + $0x158] sm:$0xff]
      %v342 = vld [vmem:[%s278 + $0x160] sm:$0xff]
      %v343 = vld [vmem:[%s278 + $0x168] sm:$0xff]
      %v344 = vld [vmem:[%s278 + $0x170] sm:$0xff]
      %v345 = vld [vmem:[%s278 + $0x178] sm:$0xff]
      %v346 = vld [vmem:[%s278 + $0x180] sm:$0xff]
      %v347 = vld [vmem:[%s278 + $0x188] sm:$0xff]
      %v348 = vld [vmem:[%s278 + $0x190] sm:$0xff]
      %v349 = vld [vmem:[%s278 + $0x198] sm:$0xff]
      %v350 = vld [vmem:[%s278 + $0x1a0] sm:$0xff]
      %v351 = vld [vmem:[%s278 + $0x1a8] sm:$0xff]
      %v352 = vld [vmem:[%s278 + $0x1b0] sm:$0xff]
      %v353 = vld [vmem:[%s278 + $0x1b8] sm:$0xff]
      %v354 = vld [vmem:[%s278 + $0x1c0] sm:$0xff]
      %v355 = vld [vmem:[%s278 + $0x1c8] sm:$0xff]
      %v356 = vld [vmem:[%s278 + $0x1d0] sm:$0xff]
      %v357 = vld [vmem:[%s278 + $0x1d8] sm:$0xff]
      %v358 = vld [vmem:[%s278 + $0x1e0] sm:$0xff]
      %v359 = vld [vmem:[%s278 + $0x1e8] sm:$0xff]
      %v360 = vld [vmem:[%s278 + $0x1f0] sm:$0xff]
      %v361 = vld [vmem:[%s278 + $0x1f8] sm:$0xff]
      %vm362 = vcmask 261120
      %v363 = vsel %vm362, %v298, 0.0
      %364 = vadd.xlane.f32.xlu0 %v363
      %v365 = vpop.xlane.xlu0 %364
      %v366 = vsel %vm362, %v299, 0.0
      %367 = vadd.xlane.f32.xlu0 %v366
      %v368 = vpop.xlane.xlu0 %367
      %v369 = vsel %vm362, %v300, 0.0
      %370 = vadd.xlane.f32.xlu0 %v369
      %v371 = vpop.xlane.xlu0 %370
      %v372 = vsel %vm362, %v301, 0.0
      %373 = vadd.xlane.f32.xlu0 %v372
      %v374 = vpop.xlane.xlu0 %373
      %v375 = vsel %vm362, %v302, 0.0
      %376 = vadd.xlane.f32.xlu0 %v375
      %v377 = vpop.xlane.xlu0 %376
      %v378 = vsel %vm362, %v303, 0.0
      %379 = vadd.xlane.f32.xlu0 %v378
      %v380 = vpop.xlane.xlu0 %379
      %v381 = vsel %vm362, %v304, 0.0
      %382 = vadd.xlane.f32.xlu0 %v381
      %v383 = vpop.xlane.xlu0 %382
      %v384 = vsel %vm362, %v305, 0.0
      %385 = vadd.xlane.f32.xlu0 %v384
      %v386 = vpop.xlane.xlu0 %385
      %v387 = vsel %vm362, %v306, 0.0
      %388 = vadd.xlane.f32.xlu0 %v387
      %v389 = vpop.xlane.xlu0 %388
      %v390 = vsel %vm362, %v307, 0.0
      %391 = vadd.xlane.f32.xlu0 %v390
      %v392 = vpop.xlane.xlu0 %391
      %v393 = vsel %vm362, %v308, 0.0
      %394 = vadd.xlane.f32.xlu0 %v393
      %v395 = vpop.xlane.xlu0 %394
      %v396 = vsel %vm362, %v309, 0.0
      %397 = vadd.xlane.f32.xlu0 %v396
      %v398 = vpop.xlane.xlu0 %397
      %v399 = vsel %vm362, %v310, 0.0
      %400 = vadd.xlane.f32.xlu0 %v399
      %v401 = vpop.xlane.xlu0 %400
      %v402 = vsel %vm362, %v311, 0.0
      %403 = vadd.xlane.f32.xlu0 %v402
      %v404 = vpop.xlane.xlu0 %403
      %v405 = vsel %vm362, %v312, 0.0
      %406 = vadd.xlane.f32.xlu0 %v405
      %v407 = vpop.xlane.xlu0 %406
      %v408 = vsel %vm362, %v313, 0.0
      %409 = vadd.xlane.f32.xlu0 %v408
      %v410 = vpop.xlane.xlu0 %409
      %v411 = vsel %vm362, %v314, 0.0
      %412 = vadd.xlane.f32.xlu0 %v411
      %v413 = vpop.xlane.xlu0 %412
      %v414 = vsel %vm362, %v315, 0.0
      %415 = vadd.xlane.f32.xlu0 %v414
      %v416 = vpop.xlane.xlu0 %415
      %v417 = vsel %vm362, %v316, 0.0
      %418 = vadd.xlane.f32.xlu0 %v417
      %v419 = vpop.xlane.xlu0 %418
      %v420 = vsel %vm362, %v317, 0.0
      %421 = vadd.xlane.f32.xlu0 %v420
      %v422 = vpop.xlane.xlu0 %421
      %v423 = vsel %vm362, %v318, 0.0
      %424 = vadd.xlane.f32.xlu0 %v423
      %v425 = vpop.xlane.xlu0 %424
      %v426 = vsel %vm362, %v319, 0.0
      %427 = vadd.xlane.f32.xlu0 %v426
      %v428 = vpop.xlane.xlu0 %427
      %v429 = vsel %vm362, %v320, 0.0
      %430 = vadd.xlane.f32.xlu0 %v429
      %v431 = vpop.xlane.xlu0 %430
      %v432 = vsel %vm362, %v321, 0.0
      %433 = vadd.xlane.f32.xlu0 %v432
      %v434 = vpop.xlane.xlu0 %433
      %v435 = vsel %vm362, %v322, 0.0
      %436 = vadd.xlane.f32.xlu0 %v435
      %v437 = vpop.xlane.xlu0 %436
      %v438 = vsel %vm362, %v323, 0.0
      %439 = vadd.xlane.f32.xlu0 %v438
      %v440 = vpop.xlane.xlu0 %439
      %v441 = vsel %vm362, %v324, 0.0
      %442 = vadd.xlane.f32.xlu0 %v441
      %v443 = vpop.xlane.xlu0 %442
      %v444 = vsel %vm362, %v325, 0.0
      %445 = vadd.xlane.f32.xlu0 %v444
      %v446 = vpop.xlane.xlu0 %445
      %v447 = vsel %vm362, %v326, 0.0
      %448 = vadd.xlane.f32.xlu0 %v447
      %v449 = vpop.xlane.xlu0 %448
      %v450 = vsel %vm362, %v327, 0.0
      %451 = vadd.xlane.f32.xlu0 %v450
      %v452 = vpop.xlane.xlu0 %451
      %v453 = vsel %vm362, %v328, 0.0
      %454 = vadd.xlane.f32.xlu0 %v453
      %v455 = vpop.xlane.xlu0 %454
      %v456 = vsel %vm362, %v329, 0.0
      %457 = vadd.xlane.f32.xlu0 %v456
      %v458 = vpop.xlane.xlu0 %457
      %v459 = vsel %vm362, %v330, 0.0
      %460 = vadd.xlane.f32.xlu0 %v459
      %v461 = vpop.xlane.xlu0 %460
      %v462 = vsel %vm362, %v331, 0.0
      %463 = vadd.xlane.f32.xlu0 %v462
      %v464 = vpop.xlane.xlu0 %463
      %v465 = vsel %vm362, %v332, 0.0
      %466 = vadd.xlane.f32.xlu0 %v465
      %v467 = vpop.xlane.xlu0 %466
      %v468 = vsel %vm362, %v333, 0.0
      %469 = vadd.xlane.f32.xlu0 %v468
      %v470 = vpop.xlane.xlu0 %469
      %v471 = vsel %vm362, %v334, 0.0
      %472 = vadd.xlane.f32.xlu0 %v471
      %v473 = vpop.xlane.xlu0 %472
      %v474 = vsel %vm362, %v335, 0.0
      %475 = vadd.xlane.f32.xlu0 %v474
      %v476 = vpop.xlane.xlu0 %475
      %v477 = vsel %vm362, %v336, 0.0
      %478 = vadd.xlane.f32.xlu0 %v477
      %v479 = vpop.xlane.xlu0 %478
      %v480 = vsel %vm362, %v337, 0.0
      %481 = vadd.xlane.f32.xlu0 %v480
      %v482 = vpop.xlane.xlu0 %481
      %v483 = vsel %vm362, %v338, 0.0
      %484 = vadd.xlane.f32.xlu0 %v483
      %v485 = vpop.xlane.xlu0 %484
      %v486 = vsel %vm362, %v339, 0.0
      %487 = vadd.xlane.f32.xlu0 %v486
      %v488 = vpop.xlane.xlu0 %487
      %v489 = vsel %vm362, %v340, 0.0
      %490 = vadd.xlane.f32.xlu0 %v489
      %v491 = vpop.xlane.xlu0 %490
      %v492 = vsel %vm362, %v341, 0.0
      %493 = vadd.xlane.f32.xlu0 %v492
      %v494 = vpop.xlane.xlu0 %493
      %v495 = vsel %vm362, %v342, 0.0
      %496 = vadd.xlane.f32.xlu0 %v495
      %v497 = vpop.xlane.xlu0 %496
      %v498 = vsel %vm362, %v343, 0.0
      %499 = vadd.xlane.f32.xlu0 %v498
      %v500 = vpop.xlane.xlu0 %499
      %v501 = vsel %vm362, %v344, 0.0
      %502 = vadd.xlane.f32.xlu0 %v501
      %v503 = vpop.xlane.xlu0 %502
      %v504 = vsel %vm362, %v345, 0.0
      %505 = vadd.xlane.f32.xlu0 %v504
      %v506 = vpop.xlane.xlu0 %505
      %v507 = vsel %vm362, %v346, 0.0
      %508 = vadd.xlane.f32.xlu0 %v507
      %v509 = vpop.xlane.xlu0 %508
      %v510 = vsel %vm362, %v347, 0.0
      %511 = vadd.xlane.f32.xlu0 %v510
      %v512 = vpop.xlane.xlu0 %511
      %v513 = vsel %vm362, %v348, 0.0
      %514 = vadd.xlane.f32.xlu0 %v513
      %v515 = vpop.xlane.xlu0 %514
      %v516 = vsel %vm362, %v349, 0.0
      %517 = vadd.xlane.f32.xlu0 %v516
      %v518 = vpop.xlane.xlu0 %517
      %v519 = vsel %vm362, %v350, 0.0
      %520 = vadd.xlane.f32.xlu0 %v519
      %v521 = vpop.xlane.xlu0 %520
      %v522 = vsel %vm362, %v351, 0.0
      %523 = vadd.xlane.f32.xlu0 %v522
      %v524 = vpop.xlane.xlu0 %523
      %v525 = vsel %vm362, %v352, 0.0
      %526 = vadd.xlane.f32.xlu0 %v525
      %v527 = vpop.xlane.xlu0 %526
      %v528 = vsel %vm362, %v353, 0.0
      %529 = vadd.xlane.f32.xlu0 %v528
      %v530 = vpop.xlane.xlu0 %529
      %v531 = vsel %vm362, %v354, 0.0
      %532 = vadd.xlane.f32.xlu0 %v531
      %v533 = vpop.xlane.xlu0 %532
      %v534 = vsel %vm362, %v355, 0.0
      %535 = vadd.xlane.f32.xlu0 %v534
      %v536 = vpop.xlane.xlu0 %535
      %v537 = vsel %vm362, %v356, 0.0
      %538 = vadd.xlane.f32.xlu0 %v537
      %v539 = vpop.xlane.xlu0 %538
      %v540 = vsel %vm362, %v357, 0.0
      %541 = vadd.xlane.f32.xlu0 %v540
      %v542 = vpop.xlane.xlu0 %541
      %v543 = vsel %vm362, %v358, 0.0
      %544 = vadd.xlane.f32.xlu0 %v543
      %v545 = vpop.xlane.xlu0 %544
      %v546 = vsel %vm362, %v359, 0.0
      %547 = vadd.xlane.f32.xlu0 %v546
      %v548 = vpop.xlane.xlu0 %547
      %v549 = vsel %vm362, %v360, 0.0
      %550 = vadd.xlane.f32.xlu0 %v549
      %v551 = vpop.xlane.xlu0 %550
      %v552 = vsel %vm362, %v361, 0.0
      %553 = vadd.xlane.f32.xlu0 %v552
      %v554 = vpop.xlane.xlu0 %553
      %v555 = vrcp.pop 32.0
      %v556 = vmul.f32 %v365, %v555
      %v557 = vmul.f32 %v368, %v555
      %v558 = vmul.f32 %v371, %v555
      %v559 = vmul.f32 %v374, %v555
      %v560 = vmul.f32 %v377, %v555
      %v561 = vmul.f32 %v380, %v555
      %v562 = vmul.f32 %v383, %v555
      %v563 = vmul.f32 %v386, %v555
      %v564 = vmul.f32 %v389, %v555
      %v565 = vmul.f32 %v392, %v555
      %v566 = vmul.f32 %v395, %v555
      %v567 = vmul.f32 %v398, %v555
      %v568 = vmul.f32 %v401, %v555
      %v569 = vmul.f32 %v404, %v555
      %v570 = vmul.f32 %v407, %v555
      %v571 = vmul.f32 %v410, %v555
      %v572 = vmul.f32 %v413, %v555
      %v573 = vmul.f32 %v416, %v555
      %v574 = vmul.f32 %v419, %v555
      %v575 = vmul.f32 %v422, %v555
      %v576 = vmul.f32 %v425, %v555
      %v577 = vmul.f32 %v428, %v555
      %v578 = vmul.f32 %v431, %v555
      %v579 = vmul.f32 %v434, %v555
      %v580 = vmul.f32 %v437, %v555
      %v581 = vmul.f32 %v440, %v555
      %v582 = vmul.f32 %v443, %v555
      %v583 = vmul.f32 %v446, %v555
      %v584 = vmul.f32 %v449, %v555
      %v585 = vmul.f32 %v452, %v555
      %v586 = vmul.f32 %v455, %v555
      %v587 = vmul.f32 %v458, %v555
      %v588 = vmul.f32 %v461, %v555
      %v589 = vmul.f32 %v464, %v555
      %v590 = vmul.f32 %v467, %v555
      %v591 = vmul.f32 %v470, %v555
      %v592 = vmul.f32 %v473, %v555
      %v593 = vmul.f32 %v476, %v555
      %v594 = vmul.f32 %v479, %v555
      %v595 = vmul.f32 %v482, %v555
      %v596 = vmul.f32 %v485, %v555
      %v597 = vmul.f32 %v488, %v555
      %v598 = vmul.f32 %v491, %v555
      %v599 = vmul.f32 %v494, %v555
      %v600 = vmul.f32 %v497, %v555
      %v601 = vmul.f32 %v500, %v555
      %v602 = vmul.f32 %v503, %v555
      %v603 = vmul.f32 %v506, %v555
      %v604 = vmul.f32 %v509, %v555
      %v605 = vmul.f32 %v512, %v555
      %v606 = vmul.f32 %v515, %v555
      %v607 = vmul.f32 %v518, %v555
      %v608 = vmul.f32 %v521, %v555
      %v609 = vmul.f32 %v524, %v555
      %v610 = vmul.f32 %v527, %v555
      %v611 = vmul.f32 %v530, %v555
      %v612 = vmul.f32 %v533, %v555
      %v613 = vmul.f32 %v536, %v555
      %v614 = vmul.f32 %v539, %v555
      %v615 = vmul.f32 %v542, %v555
      %v616 = vmul.f32 %v545, %v555
      %v617 = vmul.f32 %v548, %v555
      %v618 = vmul.f32 %v551, %v555
      %v619 = vmul.f32 %v554, %v555
      %v620 = vsub.f32 %v298, %v556
      %v621 = vsub.f32 %v299, %v557
      %v622 = vsub.f32 %v300, %v558
      %v623 = vsub.f32 %v301, %v559
      %v624 = vsub.f32 %v302, %v560
      %v625 = vsub.f32 %v303, %v561
      %v626 = vsub.f32 %v304, %v562
      %v627 = vsub.f32 %v305, %v563
      %v628 = vsub.f32 %v306, %v564
      %v629 = vsub.f32 %v307, %v565
      %v630 = vsub.f32 %v308, %v566
      %v631 = vsub.f32 %v309, %v567
      %v632 = vsub.f32 %v310, %v568
      %v633 = vsub.f32 %v311, %v569
      %v634 = vsub.f32 %v312, %v570
      %v635 = vsub.f32 %v313, %v571
      %v636 = vsub.f32 %v314, %v572
      %v637 = vsub.f32 %v315, %v573
      %v638 = vsub.f32 %v316, %v574
      %v639 = vsub.f32 %v317, %v575
      %v640 = vsub.f32 %v318, %v576
      %v641 = vsub.f32 %v319, %v577
      %v642 = vsub.f32 %v320, %v578
      %v643 = vsub.f32 %v321, %v579
      %v644 = vsub.f32 %v322, %v580
      %v645 = vsub.f32 %v323, %v581
      %v646 = vsub.f32 %v324, %v582
      %v647 = vsub.f32 %v325, %v583
      %v648 = vsub.f32 %v326, %v584
      %v649 = vsub.f32 %v327, %v585
      %v650 = vsub.f32 %v328, %v586
      %v651 = vsub.f32 %v329, %v587
      %v652 = vsub.f32 %v330, %v588
      %v653 = vsub.f32 %v331, %v589
      %v654 = vsub.f32 %v332, %v590
      %v655 = vsub.f32 %v333, %v591
      %v656 = vsub.f32 %v334, %v592
      %v657 = vsub.f32 %v335, %v593
      %v658 = vsub.f32 %v336, %v594
      %v659 = vsub.f32 %v337, %v595
      %v660 = vsub.f32 %v338, %v596
      %v661 = vsub.f32 %v339, %v597
      %v662 = vsub.f32 %v340, %v598
      %v663 = vsub.f32 %v341, %v599
      %v664 = vsub.f32 %v342, %v600
      %v665 = vsub.f32 %v343, %v601
      %v666 = vsub.f32 %v344, %v602
      %v667 = vsub.f32 %v345, %v603
      %v668 = vsub.f32 %v346, %v604
      %v669 = vsub.f32 %v347, %v605
      %v670 = vsub.f32 %v348, %v606
      %v671 = vsub.f32 %v349, %v607
      %v672 = vsub.f32 %v350, %v608
      %v673 = vsub.f32 %v351, %v609
      %v674 = vsub.f32 %v352, %v610
      %v675 = vsub.f32 %v353, %v611
      %v676 = vsub.f32 %v354, %v612
      %v677 = vsub.f32 %v355, %v613
      %v678 = vsub.f32 %v356, %v614
      %v679 = vsub.f32 %v357, %v615
      %v680 = vsub.f32 %v358, %v616
      %v681 = vsub.f32 %v359, %v617
      %v682 = vsub.f32 %v360, %v618
      %v683 = vsub.f32 %v361, %v619
      %v684 = vmul.f32 %v620, %v620
      %v685 = vmul.f32 %v621, %v621
      %v686 = vmul.f32 %v622, %v622
      %v687 = vmul.f32 %v623, %v623
      %v688 = vmul.f32 %v624, %v624
      %v689 = vmul.f32 %v625, %v625
      %v690 = vmul.f32 %v626, %v626
      %v691 = vmul.f32 %v627, %v627
      %v692 = vmul.f32 %v628, %v628
      %v693 = vmul.f32 %v629, %v629
      %v694 = vmul.f32 %v630, %v630
      %v695 = vmul.f32 %v631, %v631
      %v696 = vmul.f32 %v632, %v632
      %v697 = vmul.f32 %v633, %v633
      %v698 = vmul.f32 %v634, %v634
      %v699 = vmul.f32 %v635, %v635
      %v700 = vmul.f32 %v636, %v636
      %v701 = vmul.f32 %v637, %v637
      %v702 = vmul.f32 %v638, %v638
      %v703 = vmul.f32 %v639, %v639
      %v704 = vmul.f32 %v640, %v640
      %v705 = vmul.f32 %v641, %v641
      %v706 = vmul.f32 %v642, %v642
      %v707 = vmul.f32 %v643, %v643
      %v708 = vmul.f32 %v644, %v644
      %v709 = vmul.f32 %v645, %v645
      %v710 = vmul.f32 %v646, %v646
      %v711 = vmul.f32 %v647, %v647
      %v712 = vmul.f32 %v648, %v648
      %v713 = vmul.f32 %v649, %v649
      %v714 = vmul.f32 %v650, %v650
      %v715 = vmul.f32 %v651, %v651
      %v716 = vmul.f32 %v652, %v652
      %v717 = vmul.f32 %v653, %v653
      %v718 = vmul.f32 %v654, %v654
      %v719 = vmul.f32 %v655, %v655
      %v720 = vmul.f32 %v656, %v656
      %v721 = vmul.f32 %v657, %v657
      %v722 = vmul.f32 %v658, %v658
      %v723 = vmul.f32 %v659, %v659
      %v724 = vmul.f32 %v660, %v660
      %v725 = vmul.f32 %v661, %v661
      %v726 = vmul.f32 %v662, %v662
      %v727 = vmul.f32 %v663, %v663
      %v728 = vmul.f32 %v664, %v664
      %v729 = vmul.f32 %v665, %v665
      %v730 = vmul.f32 %v666, %v666
      %v731 = vmul.f32 %v667, %v667
      %v732 = vmul.f32 %v668, %v668
      %v733 = vmul.f32 %v669, %v669
      %v734 = vmul.f32 %v670, %v670
      %v735 = vmul.f32 %v671, %v671
      %v736 = vmul.f32 %v672, %v672
      %v737 = vmul.f32 %v673, %v673
      %v738 = vmul.f32 %v674, %v674
      %v739 = vmul.f32 %v675, %v675
      %v740 = vmul.f32 %v676, %v676
      %v741 = vmul.f32 %v677, %v677
      %v742 = vmul.f32 %v678, %v678
      %v743 = vmul.f32 %v679, %v679
      %v744 = vmul.f32 %v680, %v680
      %v745 = vmul.f32 %v681, %v681
      %v746 = vmul.f32 %v682, %v682
      %v747 = vmul.f32 %v683, %v683
      %v748 = vsel %vm362, %v684, 0.0
      %749 = vadd.xlane.f32.xlu0 %v748
      %v750 = vpop.xlane.xlu0 %749
      %v751 = vsel %vm362, %v685, 0.0
      %752 = vadd.xlane.f32.xlu0 %v751
      %v753 = vpop.xlane.xlu0 %752
      %v754 = vsel %vm362, %v686, 0.0
      %755 = vadd.xlane.f32.xlu0 %v754
      %v756 = vpop.xlane.xlu0 %755
      %v757 = vsel %vm362, %v687, 0.0
      %758 = vadd.xlane.f32.xlu0 %v757
      %v759 = vpop.xlane.xlu0 %758
      %v760 = vsel %vm362, %v688, 0.0
      %761 = vadd.xlane.f32.xlu0 %v760
      %v762 = vpop.xlane.xlu0 %761
      %v763 = vsel %vm362, %v689, 0.0
      %764 = vadd.xlane.f32.xlu0 %v763
      %v765 = vpop.xlane.xlu0 %764
      %v766 = vsel %vm362, %v690, 0.0
      %767 = vadd.xlane.f32.xlu0 %v766
      %v768 = vpop.xlane.xlu0 %767
      %v769 = vsel %vm362, %v691, 0.0
      %770 = vadd.xlane.f32.xlu0 %v769
      %v771 = vpop.xlane.xlu0 %770
      %v772 = vsel %vm362, %v692, 0.0
      %773 = vadd.xlane.f32.xlu0 %v772
      %v774 = vpop.xlane.xlu0 %773
      %v775 = vsel %vm362, %v693, 0.0
      %776 = vadd.xlane.f32.xlu0 %v775
      %v777 = vpop.xlane.xlu0 %776
      %v778 = vsel %vm362, %v694, 0.0
      %779 = vadd.xlane.f32.xlu0 %v778
      %v780 = vpop.xlane.xlu0 %779
      %v781 = vsel %vm362, %v695, 0.0
      %782 = vadd.xlane.f32.xlu0 %v781
      %v783 = vpop.xlane.xlu0 %782
      %v784 = vsel %vm362, %v696, 0.0
      %785 = vadd.xlane.f32.xlu0 %v784
      %v786 = vpop.xlane.xlu0 %785
      %v787 = vsel %vm362, %v697, 0.0
      %788 = vadd.xlane.f32.xlu0 %v787
      %v789 = vpop.xlane.xlu0 %788
      %v790 = vsel %vm362, %v698, 0.0
      %791 = vadd.xlane.f32.xlu0 %v790
      %v792 = vpop.xlane.xlu0 %791
      %v793 = vsel %vm362, %v699, 0.0
      %794 = vadd.xlane.f32.xlu0 %v793
      %v795 = vpop.xlane.xlu0 %794
      %v796 = vsel %vm362, %v700, 0.0
      %797 = vadd.xlane.f32.xlu0 %v796
      %v798 = vpop.xlane.xlu0 %797
      %v799 = vsel %vm362, %v701, 0.0
      %800 = vadd.xlane.f32.xlu0 %v799
      %v801 = vpop.xlane.xlu0 %800
      %v802 = vsel %vm362, %v702, 0.0
      %803 = vadd.xlane.f32.xlu0 %v802
      %v804 = vpop.xlane.xlu0 %803
      %v805 = vsel %vm362, %v703, 0.0
      %806 = vadd.xlane.f32.xlu0 %v805
      %v807 = vpop.xlane.xlu0 %806
      %v808 = vsel %vm362, %v704, 0.0
      %809 = vadd.xlane.f32.xlu0 %v808
      %v810 = vpop.xlane.xlu0 %809
      %v811 = vsel %vm362, %v705, 0.0
      %812 = vadd.xlane.f32.xlu0 %v811
      %v813 = vpop.xlane.xlu0 %812
      %v814 = vsel %vm362, %v706, 0.0
      %815 = vadd.xlane.f32.xlu0 %v814
      %v816 = vpop.xlane.xlu0 %815
      %v817 = vsel %vm362, %v707, 0.0
      %818 = vadd.xlane.f32.xlu0 %v817
      %v819 = vpop.xlane.xlu0 %818
      %v820 = vsel %vm362, %v708, 0.0
      %821 = vadd.xlane.f32.xlu0 %v820
      %v822 = vpop.xlane.xlu0 %821
      %v823 = vsel %vm362, %v709, 0.0
      %824 = vadd.xlane.f32.xlu0 %v823
      %v825 = vpop.xlane.xlu0 %824
      %v826 = vsel %vm362, %v710, 0.0
      %827 = vadd.xlane.f32.xlu0 %v826
      %v828 = vpop.xlane.xlu0 %827
      %v829 = vsel %vm362, %v711, 0.0
      %830 = vadd.xlane.f32.xlu0 %v829
      %v831 = vpop.xlane.xlu0 %830
      %v832 = vsel %vm362, %v712, 0.0
      %833 = vadd.xlane.f32.xlu0 %v832
      %v834 = vpop.xlane.xlu0 %833
      %v835 = vsel %vm362, %v713, 0.0
      %836 = vadd.xlane.f32.xlu0 %v835
      %v837 = vpop.xlane.xlu0 %836
      %v838 = vsel %vm362, %v714, 0.0
      %839 = vadd.xlane.f32.xlu0 %v838
      %v840 = vpop.xlane.xlu0 %839
      %v841 = vsel %vm362, %v715, 0.0
      %842 = vadd.xlane.f32.xlu0 %v841
      %v843 = vpop.xlane.xlu0 %842
      %v844 = vsel %vm362, %v716, 0.0
      %845 = vadd.xlane.f32.xlu0 %v844
      %v846 = vpop.xlane.xlu0 %845
      %v847 = vsel %vm362, %v717, 0.0
      %848 = vadd.xlane.f32.xlu0 %v847
      %v849 = vpop.xlane.xlu0 %848
      %v850 = vsel %vm362, %v718, 0.0
      %851 = vadd.xlane.f32.xlu0 %v850
      %v852 = vpop.xlane.xlu0 %851
      %v853 = vsel %vm362, %v719, 0.0
      %854 = vadd.xlane.f32.xlu0 %v853
      %v855 = vpop.xlane.xlu0 %854
      %v856 = vsel %vm362, %v720, 0.0
      %857 = vadd.xlane.f32.xlu0 %v856
      %v858 = vpop.xlane.xlu0 %857
      %v859 = vsel %vm362, %v721, 0.0
      %860 = vadd.xlane.f32.xlu0 %v859
      %v861 = vpop.xlane.xlu0 %860
      %v862 = vsel %vm362, %v722, 0.0
      %863 = vadd.xlane.f32.xlu0 %v862
      %v864 = vpop.xlane.xlu0 %863
      %v865 = vsel %vm362, %v723, 0.0
      %866 = vadd.xlane.f32.xlu0 %v865
      %v867 = vpop.xlane.xlu0 %866
      %v868 = vsel %vm362, %v724, 0.0
      %869 = vadd.xlane.f32.xlu0 %v868
      %v870 = vpop.xlane.xlu0 %869
      %v871 = vsel %vm362, %v725, 0.0
      %872 = vadd.xlane.f32.xlu0 %v871
      %v873 = vpop.xlane.xlu0 %872
      %v874 = vsel %vm362, %v726, 0.0
      %875 = vadd.xlane.f32.xlu0 %v874
      %v876 = vpop.xlane.xlu0 %875
      %v877 = vsel %vm362, %v727, 0.0
      %878 = vadd.xlane.f32.xlu0 %v877
      %v879 = vpop.xlane.xlu0 %878
      %v880 = vsel %vm362, %v728, 0.0
      %881 = vadd.xlane.f32.xlu0 %v880
      %v882 = vpop.xlane.xlu0 %881
      %v883 = vsel %vm362, %v729, 0.0
      %884 = vadd.xlane.f32.xlu0 %v883
      %v885 = vpop.xlane.xlu0 %884
      %v886 = vsel %vm362, %v730, 0.0
      %887 = vadd.xlane.f32.xlu0 %v886
      %v888 = vpop.xlane.xlu0 %887
      %v889 = vsel %vm362, %v731, 0.0
      %890 = vadd.xlane.f32.xlu0 %v889
      %v891 = vpop.xlane.xlu0 %890
      %v892 = vsel %vm362, %v732, 0.0
      %893 = vadd.xlane.f32.xlu0 %v892
      %v894 = vpop.xlane.xlu0 %893
      %v895 = vsel %vm362, %v733, 0.0
      %896 = vadd.xlane.f32.xlu0 %v895
      %v897 = vpop.xlane.xlu0 %896
      %v898 = vsel %vm362, %v734, 0.0
      %899 = vadd.xlane.f32.xlu0 %v898
      %v900 = vpop.xlane.xlu0 %899
      %v901 = vsel %vm362, %v735, 0.0
      %902 = vadd.xlane.f32.xlu0 %v901
      %v903 = vpop.xlane.xlu0 %902
      %v904 = vsel %vm362, %v736, 0.0
      %905 = vadd.xlane.f32.xlu0 %v904
      %v906 = vpop.xlane.xlu0 %905
      %v907 = vsel %vm362, %v737, 0.0
      %908 = vadd.xlane.f32.xlu0 %v907
      %v909 = vpop.xlane.xlu0 %908
      %v910 = vsel %vm362, %v738, 0.0
      %911 = vadd.xlane.f32.xlu0 %v910
      %v912 = vpop.xlane.xlu0 %911
      %v913 = vsel %vm362, %v739, 0.0
      %914 = vadd.xlane.f32.xlu0 %v913
      %v915 = vpop.xlane.xlu0 %914
      %v916 = vsel %vm362, %v740, 0.0
      %917 = vadd.xlane.f32.xlu0 %v916
      %v918 = vpop.xlane.xlu0 %917
      %v919 = vsel %vm362, %v741, 0.0
      %920 = vadd.xlane.f32.xlu0 %v919
      %v921 = vpop.xlane.xlu0 %920
      %v922 = vsel %vm362, %v742, 0.0
      %923 = vadd.xlane.f32.xlu0 %v922
      %v924 = vpop.xlane.xlu0 %923
      %v925 = vsel %vm362, %v743, 0.0
      %926 = vadd.xlane.f32.xlu0 %v925
      %v927 = vpop.xlane.xlu0 %926
      %v928 = vsel %vm362, %v744, 0.0
      %929 = vadd.xlane.f32.xlu0 %v928
      %v930 = vpop.xlane.xlu0 %929
      %v931 = vsel %vm362, %v745, 0.0
      %932 = vadd.xlane.f32.xlu0 %v931
      %v933 = vpop.xlane.xlu0 %932
      %v934 = vsel %vm362, %v746, 0.0
      %935 = vadd.xlane.f32.xlu0 %v934
      %v936 = vpop.xlane.xlu0 %935
      %v937 = vsel %vm362, %v747, 0.0
      %938 = vadd.xlane.f32.xlu0 %v937
      %v939 = vpop.xlane.xlu0 %938
      %v940 = vmul.f32 %v750, %v555
      %v941 = vmul.f32 %v753, %v555
      %v942 = vmul.f32 %v756, %v555
      %v943 = vmul.f32 %v759, %v555
      %v944 = vmul.f32 %v762, %v555
      %v945 = vmul.f32 %v765, %v555
      %v946 = vmul.f32 %v768, %v555
      %v947 = vmul.f32 %v771, %v555
      %v948 = vmul.f32 %v774, %v555
      %v949 = vmul.f32 %v777, %v555
      %v950 = vmul.f32 %v780, %v555
      %v951 = vmul.f32 %v783, %v555
      %v952 = vmul.f32 %v786, %v555
      %v953 = vmul.f32 %v789, %v555
      %v954 = vmul.f32 %v792, %v555
      %v955 = vmul.f32 %v795, %v555
      %v956 = vmul.f32 %v798, %v555
      %v957 = vmul.f32 %v801, %v555
      %v958 = vmul.f32 %v804, %v555
      %v959 = vmul.f32 %v807, %v555
      %v960 = vmul.f32 %v810, %v555
      %v961 = vmul.f32 %v813, %v555
      %v962 = vmul.f32 %v816, %v555
      %v963 = vmul.f32 %v819, %v555
      %v964 = vmul.f32 %v822, %v555
      %v965 = vmul.f32 %v825, %v555
      %v966 = vmul.f32 %v828, %v555
      %v967 = vmul.f32 %v831, %v555
      %v968 = vmul.f32 %v834, %v555
      %v969 = vmul.f32 %v837, %v555
      %v970 = vmul.f32 %v840, %v555
      %v971 = vmul.f32 %v843, %v555
      %v972 = vmul.f32 %v846, %v555
      %v973 = vmul.f32 %v849, %v555
      %v974 = vmul.f32 %v852, %v555
      %v975 = vmul.f32 %v855, %v555
      %v976 = vmul.f32 %v858, %v555
      %v977 = vmul.f32 %v861, %v555
      %v978 = vmul.f32 %v864, %v555
      %v979 = vmul.f32 %v867, %v555
      %v980 = vmul.f32 %v870, %v555
      %v981 = vmul.f32 %v873, %v555
      %v982 = vmul.f32 %v876, %v555
      %v983 = vmul.f32 %v879, %v555
      %v984 = vmul.f32 %v882, %v555
      %v985 = vmul.f32 %v885, %v555
      %v986 = vmul.f32 %v888, %v555
      %v987 = vmul.f32 %v891, %v555
      %v988 = vmul.f32 %v894, %v555
      %v989 = vmul.f32 %v897, %v555
      %v990 = vmul.f32 %v900, %v555
      %v991 = vmul.f32 %v903, %v555
      %v992 = vmul.f32 %v906, %v555
      %v993 = vmul.f32 %v909, %v555
      %v994 = vmul.f32 %v912, %v555
      %v995 = vmul.f32 %v915, %v555
      %v996 = vmul.f32 %v918, %v555
      %v997 = vmul.f32 %v921, %v555
      %v998 = vmul.f32 %v924, %v555
      %v999 = vmul.f32 %v927, %v555
      %v1000 = vmul.f32 %v930, %v555
      %v1001 = vmul.f32 %v933, %v555
      %v1002 = vmul.f32 %v936, %v555
      %v1003 = vmul.f32 %v939, %v555
      %v1004 = vadd.f32 %v940, 1e-05
      %v1005 = vadd.f32 %v941, 1e-05
      %v1006 = vadd.f32 %v942, 1e-05
      %v1007 = vadd.f32 %v943, 1e-05
      %v1008 = vadd.f32 %v944, 1e-05
      %v1009 = vadd.f32 %v945, 1e-05
      %v1010 = vadd.f32 %v946, 1e-05
      %v1011 = vadd.f32 %v947, 1e-05
      %v1012 = vadd.f32 %v948, 1e-05
      %v1013 = vadd.f32 %v949, 1e-05
      %v1014 = vadd.f32 %v950, 1e-05
      %v1015 = vadd.f32 %v951, 1e-05
      %v1016 = vadd.f32 %v952, 1e-05
      %v1017 = vadd.f32 %v953, 1e-05
      %v1018 = vadd.f32 %v954, 1e-05
      %v1019 = vadd.f32 %v955, 1e-05
      %v1020 = vadd.f32 %v956, 1e-05
      %v1021 = vadd.f32 %v957, 1e-05
      %v1022 = vadd.f32 %v958, 1e-05
      %v1023 = vadd.f32 %v959, 1e-05
      %v1024 = vadd.f32 %v960, 1e-05
      %v1025 = vadd.f32 %v961, 1e-05
      %v1026 = vadd.f32 %v962, 1e-05
      %v1027 = vadd.f32 %v963, 1e-05
      %v1028 = vadd.f32 %v964, 1e-05
      %v1029 = vadd.f32 %v965, 1e-05
      %v1030 = vadd.f32 %v966, 1e-05
      %v1031 = vadd.f32 %v967, 1e-05
      %v1032 = vadd.f32 %v968, 1e-05
      %v1033 = vadd.f32 %v969, 1e-05
      %v1034 = vadd.f32 %v970, 1e-05
      %v1035 = vadd.f32 %v971, 1e-05
      %v1036 = vadd.f32 %v972, 1e-05
      %v1037 = vadd.f32 %v973, 1e-05
      %v1038 = vadd.f32 %v974, 1e-05
      %v1039 = vadd.f32 %v975, 1e-05
      %v1040 = vadd.f32 %v976, 1e-05
      %v1041 = vadd.f32 %v977, 1e-05
      %v1042 = vadd.f32 %v978, 1e-05
      %v1043 = vadd.f32 %v979, 1e-05
      %v1044 = vadd.f32 %v980, 1e-05
      %v1045 = vadd.f32 %v981, 1e-05
      %v1046 = vadd.f32 %v982, 1e-05
      %v1047 = vadd.f32 %v983, 1e-05
      %v1048 = vadd.f32 %v984, 1e-05
      %v1049 = vadd.f32 %v985, 1e-05
      %v1050 = vadd.f32 %v986, 1e-05
      %v1051 = vadd.f32 %v987, 1e-05
      %v1052 = vadd.f32 %v988, 1e-05
      %v1053 = vadd.f32 %v989, 1e-05
      %v1054 = vadd.f32 %v990, 1e-05
      %v1055 = vadd.f32 %v991, 1e-05
      %v1056 = vadd.f32 %v992, 1e-05
      %v1057 = vadd.f32 %v993, 1e-05
      %v1058 = vadd.f32 %v994, 1e-05
      %v1059 = vadd.f32 %v995, 1e-05
      %v1060 = vadd.f32 %v996, 1e-05
      %v1061 = vadd.f32 %v997, 1e-05
      %v1062 = vadd.f32 %v998, 1e-05
      %v1063 = vadd.f32 %v999, 1e-05
      %v1064 = vadd.f32 %v1000, 1e-05
      %v1065 = vadd.f32 %v1001, 1e-05
      %v1066 = vadd.f32 %v1002, 1e-05
      %v1067 = vadd.f32 %v1003, 1e-05
      %v1068 = vrsqrt.pop %v1004
      %v1069 = vrsqrt.pop %v1005
      %v1070 = vrsqrt.pop %v1006
      %v1071 = vrsqrt.pop %v1007
      %v1072 = vrsqrt.pop %v1008
      %v1073 = vrsqrt.pop %v1009
      %v1074 = vrsqrt.pop %v1010
      %v1075 = vrsqrt.pop %v1011
      %v1076 = vrsqrt.pop %v1012
      %v1077 = vrsqrt.pop %v1013
      %v1078 = vrsqrt.pop %v1014
      %v1079 = vrsqrt.pop %v1015
      %v1080 = vrsqrt.pop %v1016
      %v1081 = vrsqrt.pop %v1017
      %v1082 = vrsqrt.pop %v1018
      %v1083 = vrsqrt.pop %v1019
      %v1084 = vrsqrt.pop %v1020
      %v1085 = vrsqrt.pop %v1021
      %v1086 = vrsqrt.pop %v1022
      %v1087 = vrsqrt.pop %v1023
      %v1088 = vrsqrt.pop %v1024
      %v1089 = vrsqrt.pop %v1025
      %v1090 = vrsqrt.pop %v1026
      %v1091 = vrsqrt.pop %v1027
      %v1092 = vrsqrt.pop %v1028
      %v1093 = vrsqrt.pop %v1029
      %v1094 = vrsqrt.pop %v1030
      %v1095 = vrsqrt.pop %v1031
      %v1096 = vrsqrt.pop %v1032
      %v1097 = vrsqrt.pop %v1033
      %v1098 = vrsqrt.pop %v1034
      %v1099 = vrsqrt.pop %v1035
      %v1100 = vrsqrt.pop %v1036
      %v1101 = vrsqrt.pop %v1037
      %v1102 = vrsqrt.pop %v1038
      %v1103 = vrsqrt.pop %v1039
      %v1104 = vrsqrt.pop %v1040
      %v1105 = vrsqrt.pop %v1041
      %v1106 = vrsqrt.pop %v1042
      %v1107 = vrsqrt.pop %v1043
      %v1108 = vrsqrt.pop %v1044
      %v1109 = vrsqrt.pop %v1045
      %v1110 = vrsqrt.pop %v1046
      %v1111 = vrsqrt.pop %v1047
      %v1112 = vrsqrt.pop %v1048
      %v1113 = vrsqrt.pop %v1049
      %v1114 = vrsqrt.pop %v1050
      %v1115 = vrsqrt.pop %v1051
      %v1116 = vrsqrt.pop %v1052
      %v1117 = vrsqrt.pop %v1053
      %v1118 = vrsqrt.pop %v1054
      %v1119 = vrsqrt.pop %v1055
      %v1120 = vrsqrt.pop %v1056
      %v1121 = vrsqrt.pop %v1057
      %v1122 = vrsqrt.pop %v1058
      %v1123 = vrsqrt.pop %v1059
      %v1124 = vrsqrt.pop %v1060
      %v1125 = vrsqrt.pop %v1061
      %v1126 = vrsqrt.pop %v1062
      %v1127 = vrsqrt.pop %v1063
      %v1128 = vrsqrt.pop %v1064
      %v1129 = vrsqrt.pop %v1065
      %v1130 = vrsqrt.pop %v1066
      %v1131 = vrsqrt.pop %v1067
      %v1132 = vmul.f32 %v620, %v1068
      %v1133 = vmul.f32 %v621, %v1069
      %v1134 = vmul.f32 %v622, %v1070
      %v1135 = vmul.f32 %v623, %v1071
      %v1136 = vmul.f32 %v624, %v1072
      %v1137 = vmul.f32 %v625, %v1073
      %v1138 = vmul.f32 %v626, %v1074
      %v1139 = vmul.f32 %v627, %v1075
      %v1140 = vmul.f32 %v628, %v1076
      %v1141 = vmul.f32 %v629, %v1077
      %v1142 = vmul.f32 %v630, %v1078
      %v1143 = vmul.f32 %v631, %v1079
      %v1144 = vmul.f32 %v632, %v1080
      %v1145 = vmul.f32 %v633, %v1081
      %v1146 = vmul.f32 %v634, %v1082
      %v1147 = vmul.f32 %v635, %v1083
      %v1148 = vmul.f32 %v636, %v1084
      %v1149 = vmul.f32 %v637, %v1085
      %v1150 = vmul.f32 %v638, %v1086
      %v1151 = vmul.f32 %v639, %v1087
      %v1152 = vmul.f32 %v640, %v1088
      %v1153 = vmul.f32 %v641, %v1089
      %v1154 = vmul.f32 %v642, %v1090
      %v1155 = vmul.f32 %v643, %v1091
      %v1156 = vmul.f32 %v644, %v1092
      %v1157 = vmul.f32 %v645, %v1093
      %v1158 = vmul.f32 %v646, %v1094
      %v1159 = vmul.f32 %v647, %v1095
      %v1160 = vmul.f32 %v648, %v1096
      %v1161 = vmul.f32 %v649, %v1097
      %v1162 = vmul.f32 %v650, %v1098
      %v1163 = vmul.f32 %v651, %v1099
      %v1164 = vmul.f32 %v652, %v1100
      %v1165 = vmul.f32 %v653, %v1101
      %v1166 = vmul.f32 %v654, %v1102
      %v1167 = vmul.f32 %v655, %v1103
      %v1168 = vmul.f32 %v656, %v1104
      %v1169 = vmul.f32 %v657, %v1105
      %v1170 = vmul.f32 %v658, %v1106
      %v1171 = vmul.f32 %v659, %v1107
      %v1172 = vmul.f32 %v660, %v1108
      %v1173 = vmul.f32 %v661, %v1109
      %v1174 = vmul.f32 %v662, %v1110
      %v1175 = vmul.f32 %v663, %v1111
      %v1176 = vmul.f32 %v664, %v1112
      %v1177 = vmul.f32 %v665, %v1113
      %v1178 = vmul.f32 %v666, %v1114
      %v1179 = vmul.f32 %v667, %v1115
      %v1180 = vmul.f32 %v668, %v1116
      %v1181 = vmul.f32 %v669, %v1117
      %v1182 = vmul.f32 %v670, %v1118
      %v1183 = vmul.f32 %v671, %v1119
      %v1184 = vmul.f32 %v672, %v1120
      %v1185 = vmul.f32 %v673, %v1121
      %v1186 = vmul.f32 %v674, %v1122
      %v1187 = vmul.f32 %v675, %v1123
      %v1188 = vmul.f32 %v676, %v1124
      %v1189 = vmul.f32 %v677, %v1125
      %v1190 = vmul.f32 %v678, %v1126
      %v1191 = vmul.f32 %v679, %v1127
      %v1192 = vmul.f32 %v680, %v1128
      %v1193 = vmul.f32 %v681, %v1129
      %v1194 = vmul.f32 %v682, %v1130
      %v1195 = vmul.f32 %v683, %v1131
      %v1196 = vld [vmem:[%s1] sm:$0x1]
      %v1198 = vlaneseq
      %v1199 = vshrl.u32 %v1198, 7
      %v1200 = vsub.s32 0, %v1199
      %v1201 = vrot.slane %v1196, %v1200
      %v1203 = vmul.f32 %v1132, %v1201
      %v1204 = vmul.f32 %v1133, %v1201
      %v1205 = vmul.f32 %v1134, %v1201
      %v1206 = vmul.f32 %v1135, %v1201
      %v1207 = vmul.f32 %v1136, %v1201
      %v1208 = vmul.f32 %v1137, %v1201
      %v1209 = vmul.f32 %v1138, %v1201
      %v1210 = vmul.f32 %v1139, %v1201
      %v1211 = vmul.f32 %v1140, %v1201
      %v1212 = vmul.f32 %v1141, %v1201
      %v1213 = vmul.f32 %v1142, %v1201
      %v1214 = vmul.f32 %v1143, %v1201
      %v1215 = vmul.f32 %v1144, %v1201
      %v1216 = vmul.f32 %v1145, %v1201
      %v1217 = vmul.f32 %v1146, %v1201
      %v1218 = vmul.f32 %v1147, %v1201
      %v1219 = vmul.f32 %v1148, %v1201
      %v1220 = vmul.f32 %v1149, %v1201
      %v1221 = vmul.f32 %v1150, %v1201
      %v1222 = vmul.f32 %v1151, %v1201
      %v1223 = vmul.f32 %v1152, %v1201
      %v1224 = vmul.f32 %v1153, %v1201
      %v1225 = vmul.f32 %v1154, %v1201
      %v1226 = vmul.f32 %v1155, %v1201
      %v1227 = vmul.f32 %v1156, %v1201
      %v1228 = vmul.f32 %v1157, %v1201
      %v1229 = vmul.f32 %v1158, %v1201
      %v1230 = vmul.f32 %v1159, %v1201
      %v1231 = vmul.f32 %v1160, %v1201
      %v1232 = vmul.f32 %v1161, %v1201
      %v1233 = vmul.f32 %v1162, %v1201
      %v1234 = vmul.f32 %v1163, %v1201
      %v1235 = vmul.f32 %v1164, %v1201
      %v1236 = vmul.f32 %v1165, %v1201
      %v1237 = vmul.f32 %v1166, %v1201
      %v1238 = vmul.f32 %v1167, %v1201
      %v1239 = vmul.f32 %v1168, %v1201
      %v1240 = vmul.f32 %v1169, %v1201
      %v1241 = vmul.f32 %v1170, %v1201
      %v1242 = vmul.f32 %v1171, %v1201
      %v1243 = vmul.f32 %v1172, %v1201
      %v1244 = vmul.f32 %v1173, %v1201
      %v1245 = vmul.f32 %v1174, %v1201
      %v1246 = vmul.f32 %v1175, %v1201
      %v1247 = vmul.f32 %v1176, %v1201
      %v1248 = vmul.f32 %v1177, %v1201
      %v1249 = vmul.f32 %v1178, %v1201
      %v1250 = vmul.f32 %v1179, %v1201
      %v1251 = vmul.f32 %v1180, %v1201
      %v1252 = vmul.f32 %v1181, %v1201
      %v1253 = vmul.f32 %v1182, %v1201
      %v1254 = vmul.f32 %v1183, %v1201
      %v1255 = vmul.f32 %v1184, %v1201
      %v1256 = vmul.f32 %v1185, %v1201
      %v1257 = vmul.f32 %v1186, %v1201
      %v1258 = vmul.f32 %v1187, %v1201
      %v1259 = vmul.f32 %v1188, %v1201
      %v1260 = vmul.f32 %v1189, %v1201
      %v1261 = vmul.f32 %v1190, %v1201
      %v1262 = vmul.f32 %v1191, %v1201
      %v1263 = vmul.f32 %v1192, %v1201
      %v1264 = vmul.f32 %v1193, %v1201
      %v1265 = vmul.f32 %v1194, %v1201
      %v1266 = vmul.f32 %v1195, %v1201
      %v1267 = vld [vmem:[%s2] sm:$0x1]
      %v1269 = vlaneseq
      %v1270 = vshrl.u32 %v1269, 7
      %v1271 = vsub.s32 0, %v1270
      %v1272 = vrot.slane %v1267, %v1271
      %v1274 = vadd.f32 %v1203, %v1272
      %v1275 = vadd.f32 %v1204, %v1272
      %v1276 = vadd.f32 %v1205, %v1272
      %v1277 = vadd.f32 %v1206, %v1272
      %v1278 = vadd.f32 %v1207, %v1272
      %v1279 = vadd.f32 %v1208, %v1272
      %v1280 = vadd.f32 %v1209, %v1272
      %v1281 = vadd.f32 %v1210, %v1272
      %v1282 = vadd.f32 %v1211, %v1272
      %v1283 = vadd.f32 %v1212, %v1272
      %v1284 = vadd.f32 %v1213, %v1272
      %v1285 = vadd.f32 %v1214, %v1272
      %v1286 = vadd.f32 %v1215, %v1272
      %v1287 = vadd.f32 %v1216, %v1272
      %v1288 = vadd.f32 %v1217, %v1272
      %v1289 = vadd.f32 %v1218, %v1272
      %v1290 = vadd.f32 %v1219, %v1272
      %v1291 = vadd.f32 %v1220, %v1272
      %v1292 = vadd.f32 %v1221, %v1272
      %v1293 = vadd.f32 %v1222, %v1272
      %v1294 = vadd.f32 %v1223, %v1272
      %v1295 = vadd.f32 %v1224, %v1272
      %v1296 = vadd.f32 %v1225, %v1272
      %v1297 = vadd.f32 %v1226, %v1272
      %v1298 = vadd.f32 %v1227, %v1272
      %v1299 = vadd.f32 %v1228, %v1272
      %v1300 = vadd.f32 %v1229, %v1272
      %v1301 = vadd.f32 %v1230, %v1272
      %v1302 = vadd.f32 %v1231, %v1272
      %v1303 = vadd.f32 %v1232, %v1272
      %v1304 = vadd.f32 %v1233, %v1272
      %v1305 = vadd.f32 %v1234, %v1272
      %v1306 = vadd.f32 %v1235, %v1272
      %v1307 = vadd.f32 %v1236, %v1272
      %v1308 = vadd.f32 %v1237, %v1272
      %v1309 = vadd.f32 %v1238, %v1272
      %v1310 = vadd.f32 %v1239, %v1272
      %v1311 = vadd.f32 %v1240, %v1272
      %v1312 = vadd.f32 %v1241, %v1272
      %v1313 = vadd.f32 %v1242, %v1272
      %v1314 = vadd.f32 %v1243, %v1272
      %v1315 = vadd.f32 %v1244, %v1272
      %v1316 = vadd.f32 %v1245, %v1272
      %v1317 = vadd.f32 %v1246, %v1272
      %v1318 = vadd.f32 %v1247, %v1272
      %v1319 = vadd.f32 %v1248, %v1272
      %v1320 = vadd.f32 %v1249, %v1272
      %v1321 = vadd.f32 %v1250, %v1272
      %v1322 = vadd.f32 %v1251, %v1272
      %v1323 = vadd.f32 %v1252, %v1272
      %v1324 = vadd.f32 %v1253, %v1272
      %v1325 = vadd.f32 %v1254, %v1272
      %v1326 = vadd.f32 %v1255, %v1272
      %v1327 = vadd.f32 %v1256, %v1272
      %v1328 = vadd.f32 %v1257, %v1272
      %v1329 = vadd.f32 %v1258, %v1272
      %v1330 = vadd.f32 %v1259, %v1272
      %v1331 = vadd.f32 %v1260, %v1272
      %v1332 = vadd.f32 %v1261, %v1272
      %v1333 = vadd.f32 %v1262, %v1272
      %v1334 = vadd.f32 %v1263, %v1272
      %v1335 = vadd.f32 %v1264, %v1272
      %v1336 = vadd.f32 %v1265, %v1272
      %v1337 = vadd.f32 %v1266, %v1272
      %v1338 = vld [vmem:[%s284] sm:$0xff]
      %v1339 = vld [vmem:[%s284 + $0x8] sm:$0xff]
      %v1340 = vld [vmem:[%s284 + $0x10] sm:$0xff]
      %v1341 = vld [vmem:[%s284 + $0x18] sm:$0xff]
      %v1342 = vld [vmem:[%s284 + $0x20] sm:$0xff]
      %v1343 = vld [vmem:[%s284 + $0x28] sm:$0xff]
      %v1344 = vld [vmem:[%s284 + $0x30] sm:$0xff]
      %v1345 = vld [vmem:[%s284 + $0x38] sm:$0xff]
      %v1346 = vld [vmem:[%s287] sm:$0x1]
      %v1348 = vlaneseq
      %v1349 = vshrl.u32 %v1348, 7
      %v1350 = vsub.s32 0, %v1349
      %v1351 = vrot.slane %v1346, %v1350
      %v1354 = vsel %vm362, %v1274, 0
      %v1357 = vsel %vm362, %v1275, 0
      %v1360 = vsel %vm362, %v1276, 0
      %v1363 = vsel %vm362, %v1277, 0
      %v1366 = vsel %vm362, %v1278, 0
      %v1369 = vsel %vm362, %v1279, 0
      %v1372 = vsel %vm362, %v1280, 0
      %v1375 = vsel %vm362, %v1281, 0
      %v1378 = vsel %vm362, %v1282, 0
      %v1381 = vsel %vm362, %v1283, 0
      %v1384 = vsel %vm362, %v1284, 0
      %v1387 = vsel %vm362, %v1285, 0
      %v1390 = vsel %vm362, %v1286, 0
      %v1393 = vsel %vm362, %v1287, 0
      %v1396 = vsel %vm362, %v1288, 0
      %v1399 = vsel %vm362, %v1289, 0
      %v1402 = vsel %vm362, %v1290, 0
      %v1405 = vsel %vm362, %v1291, 0
      %v1408 = vsel %vm362, %v1292, 0
      %v1411 = vsel %vm362, %v1293, 0
      %v1414 = vsel %vm362, %v1294, 0
      %v1417 = vsel %vm362, %v1295, 0
      %v1420 = vsel %vm362, %v1296, 0
      %v1423 = vsel %vm362, %v1297, 0
      %v1426 = vsel %vm362, %v1298, 0
      %v1429 = vsel %vm362, %v1299, 0
      %v1432 = vsel %vm362, %v1300, 0
      %v1435 = vsel %vm362, %v1301, 0
      %v1438 = vsel %vm362, %v1302, 0
      %v1441 = vsel %vm362, %v1303, 0
      %v1444 = vsel %vm362, %v1304, 0
      %v1447 = vsel %vm362, %v1305, 0
      %v1450 = vsel %vm362, %v1306, 0
      %v1453 = vsel %vm362, %v1307, 0
      %v1456 = vsel %vm362, %v1308, 0
      %v1459 = vsel %vm362, %v1309, 0
      %v1462 = vsel %vm362, %v1310, 0
      %v1465 = vsel %vm362, %v1311, 0
      %v1468 = vsel %vm362, %v1312, 0
      %v1471 = vsel %vm362, %v1313, 0
      %v1474 = vsel %vm362, %v1314, 0
      %v1477 = vsel %vm362, %v1315, 0
      %v1480 = vsel %vm362, %v1316, 0
      %v1483 = vsel %vm362, %v1317, 0
      %v1486 = vsel %vm362, %v1318, 0
      %v1489 = vsel %vm362, %v1319, 0
      %v1492 = vsel %vm362, %v1320, 0
      %v1495 = vsel %vm362, %v1321, 0
      %v1498 = vsel %vm362, %v1322, 0
      %v1501 = vsel %vm362, %v1323, 0
      %v1504 = vsel %vm362, %v1324, 0
      %v1507 = vsel %vm362, %v1325, 0
      %v1510 = vsel %vm362, %v1326, 0
      %v1513 = vsel %vm362, %v1327, 0
      %v1516 = vsel %vm362, %v1328, 0
      %v1519 = vsel %vm362, %v1329, 0
      %v1522 = vsel %vm362, %v1330, 0
      %v1525 = vsel %vm362, %v1331, 0
      %v1528 = vsel %vm362, %v1332, 0
      %v1531 = vsel %vm362, %v1333, 0
      %v1534 = vsel %vm362, %v1334, 0
      %v1537 = vsel %vm362, %v1335, 0
      %v1540 = vsel %vm362, %v1336, 0
      %v1543 = vsel %vm362, %v1337, 0
      %v1546 = vsel %vm362, %v1338, 0
      %v1549 = vsel %vm362, %v1339, 0
      %v1552 = vsel %vm362, %v1340, 0
      %v1555 = vsel %vm362, %v1341, 0
      %v1558 = vsel %vm362, %v1342, 0
      %v1561 = vsel %vm362, %v1343, 0
      %v1564 = vsel %vm362, %v1344, 0
      %v1567 = vsel %vm362, %v1345, 0
      %1569 = vmatprep.subr.mxu0 0.0
      %1570 = vmatpush1.xpose.msra.mxu0 %v1546
      %1571 = vmatprep.subr.mxu0 0.0
      %1572 = vmatpush1.xpose.msra.mxu0 %v1549
      %1573 = vmatprep.subr.mxu0 0.0
      %1574 = vmatpush1.xpose.msra.mxu0 %v1552
      %1575 = vmatprep.subr.mxu0 0.0
      %1576 = vmatpush1.xpose.msra.mxu0 %v1555
      %1577 = vmatprep.subr.mxu0 0.0
      %1578 = vmatpush1.xpose.msra.mxu0 %v1558
      %1579 = vmatprep.subr.mxu0 0.0
      %1580 = vmatpush1.xpose.msra.mxu0 %v1561
      %1581 = vmatprep.subr.mxu0 0.0
      %1582 = vmatpush1.xpose.msra.mxu0 %v1564
      %1583 = vmatprep.subr.mxu0 0.0
      %1584 = vmatpush1.xpose.msra.mxu0 %v1567
      %1585 = vmatprep.subr.mxu0 0.0
      %1586 = vmatpush1.xpose.msra.mxu0 0.0
      %1587 = vmatprep.subr.mxu0 0.0
      %1588 = vmatpush1.xpose.msra.mxu0 0.0
      %1589 = vmatprep.subr.mxu0 0.0
      %1590 = vmatpush1.xpose.msra.mxu0 0.0
      %1591 = vmatprep.subr.mxu0 0.0
      %1592 = vmatpush1.xpose.msra.mxu0 0.0
      %1593 = vmatprep.subr.mxu0 0.0
      %1594 = vmatpush1.xpose.msra.mxu0 0.0
      %1595 = vmatprep.subr.mxu0 0.0
      %1596 = vmatpush1.xpose.msra.mxu0 0.0
      %1597 = vmatprep.subr.mxu0 0.0
      %1598 = vmatpush1.xpose.msra.mxu0 0.0
      %1599 = vmatprep.subr.mxu0 0.0
      %1600 = vmatpush1.xpose.msra.mxu0 0.0
      %1601 = vmatprep.subr.mxu0 0.0
      %1602 = vmatpush1.xpose.msra.mxu0 0.0
      %1603 = vmatprep.subr.mxu0 0.0
      %1604 = vmatpush1.xpose.msra.mxu0 0.0
      %1605 = vmatprep.subr.mxu0 0.0
      %1606 = vmatpush1.xpose.msra.mxu0 0.0
      %1607 = vmatprep.subr.mxu0 0.0
      %1608 = vmatpush1.xpose.msra.mxu0 0.0
      %1609 = vmatprep.subr.mxu0 0.0
      %1610 = vmatpush1.xpose.msra.mxu0 0.0
      %1611 = vmatprep.subr.mxu0 0.0
      %1612 = vmatpush1.xpose.msra.mxu0 0.0
      %1613 = vmatprep.subr.mxu0 0.0
      %1614 = vmatpush1.xpose.msra.mxu0 0.0
      %1615 = vmatprep.subr.mxu0 0.0
      %1616 = vmatpush1.xpose.msra.mxu0 0.0
      %1617 = vmatprep.subr.mxu0 0.0
      %1618 = vmatpush1.xpose.msra.mxu0 0.0
      %1619 = vmatprep.subr.mxu0 0.0
      %1620 = vmatpush1.xpose.msra.mxu0 0.0
      %1621 = vmatprep.subr.mxu0 0.0
      %1622 = vmatpush1.xpose.msra.mxu0 0.0
      %1623 = vmatprep.subr.mxu0 0.0
      %1624 = vmatpush1.xpose.msra.mxu0 0.0
      %1625 = vmatprep.subr.mxu0 0.0
      %1626 = vmatpush1.xpose.msra.mxu0 0.0
      %1627 = vmatprep.subr.mxu0 0.0
      %1628 = vmatpush1.xpose.msra.mxu0 0.0
      %1629 = vmatprep.subr.mxu0 0.0
      %1630 = vmatpush1.xpose.msra.mxu0 0.0
      %1631 = vmatprep.subr.mxu0 0.0
      %1632 = vmatpush1.xpose.msra.mxu0 0.0
      %1633 = vmatprep.mubr.f32.mxu0 0.0
      %1634 = vmatmul.mubr.f32.gmra.mrb[0].mxu0 %v1354
      %v1635 = vpop.f32.mrb[0].mxu0
      %v1636 = vadd.f32 %v1351, %v1635
      %v1637 = vpop.f32.mrb[0].mxu0
      %1638 = vmatprep.mubr.f32.mxu0 0.0
      %1639 = vmatmul.mubr.f32.gmra.mrb[0].mxu0 %v1357
      %v1640 = vpop.f32.mrb[0].mxu0
      %v1641 = vadd.f32 %v1351, %v1640
      %v1642 = vpop.f32.mrb[0].mxu0
      %1643 = vmatprep.mubr.f32.mxu0 0.0
      %1644 = vmatmul.mubr.f32.gmra.mrb[0].mxu0 %v1360
      %v1645 = vpop.f32.mrb[0].mxu0
      %v1646 = vadd.f32 %v1351, %v1645
      %v1647 = vpop.f32.mrb[0].mxu0
      %1648 = vmatprep.mubr.f32.mxu0 0.0
      %1649 = vmatmul.mubr.f32.gmra.mrb[0].mxu0 %v1363
      %v1650 = vpop.f32.mrb[0].mxu0
      %v1651 = vadd.f32 %v1351, %v1650
      %v1652 = vpop.f32.mrb[0].mxu0
      %1653 = vmatprep.mubr.f32.mxu0 0.0
      %1654 = vmatmul.mubr.f32.gmra.mrb[0].mxu0 %v1366
      %v1655 = vpop.f32.mrb[0].mxu0
      %v1656 = vadd.f32 %v1351, %v1655
      %v1657 = vpop.f32.mrb[0].mxu0
      %1658 = vmatprep.mubr.f32.mxu0 0.0
      %1659 = vmatmul.mubr.f32.gmra.mrb[0].mxu0 %v1369
      %v1660 = vpop.f32.mrb[0].mxu0
      %v1661 = vadd.f32 %v1351, %v1660
      %v1662 = vpop.f32.mrb[0].mxu0
      %1663 = vmatprep.mubr.f32.mxu0 0.0
      %1664 = vmatmul.mubr.f32.gmra.mrb[0].mxu0 %v1372
      %v1665 = vpop.f32.mrb[0].mxu0
      %v1666 = vadd.f32 %v1351, %v1665
      %v1667 = vpop.f32.mrb[0].mxu0
      %1668 = vmatprep.mubr.f32.mxu0 0.0
      %1669 = vmatmul.mubr.f32.gmra.mrb[0].mxu0 %v1375
      %v1670 = vpop.f32.mrb[0].mxu0
      %v1671 = vadd.f32 %v1351, %v1670
      %v1672 = vpop.f32.mrb[0].mxu0
      %1673 = vmatprep.mubr.f32.mxu0 0.0
      %1674 = vmatmul.mubr.f32.gmra.mrb[0].mxu0 %v1378
      %v1675 = vpop.f32.mrb[0].mxu0
      %v1676 = vadd.f32 %v1351, %v1675
      %v1677 = vpop.f32.mrb[0].mxu0
      %1678 = vmatprep.mubr.f32.mxu0 0.0
      %1679 = vmatmul.mubr.f32.gmra.mrb[0].mxu0 %v1381
      %v1680 = vpop.f32.mrb[0].mxu0
      %v1681 = vadd.f32 %v1351, %v1680
      %v1682 = vpop.f32.mrb[0].mxu0
      %1683 = vmatprep.mubr.f32.mxu0 0.0
      %1684 = vmatmul.mubr.f32.gmra.mrb[0].mxu0 %v1384
      %v1685 = vpop.f32.mrb[0].mxu0
      %v1686 = vadd.f32 %v1351, %v1685
      %v1687 = vpop.f32.mrb[0].mxu0
      %1688 = vmatprep.mubr.f32.mxu0 0.0
      %1689 = vmatmul.mubr.f32.gmra.mrb[0].mxu0 %v1387
      %v1690 = vpop.f32.mrb[0].mxu0
      %v1691 = vadd.f32 %v1351, %v1690
      %v1692 = vpop.f32.mrb[0].mxu0
      %1693 = vmatprep.mubr.f32.mxu0 0.0
      %1694 = vmatmul.mubr.f32.gmra.mrb[0].mxu0 %v1390
      %v1695 = vpop.f32.mrb[0].mxu0
      %v1696 = vadd.f32 %v1351, %v1695
      %v1697 = vpop.f32.mrb[0].mxu0
      %1698 = vmatprep.mubr.f32.mxu0 0.0
      %1699 = vmatmul.mubr.f32.gmra.mrb[0].mxu0 %v1393
      %v1700 = vpop.f32.mrb[0].mxu0
      %v1701 = vadd.f32 %v1351, %v1700
      %v1702 = vpop.f32.mrb[0].mxu0
      %1703 = vmatprep.mubr.f32.mxu0 0.0
      %1704 = vmatmul.mubr.f32.gmra.mrb[0].mxu0 %v1396
      %v1705 = vpop.f32.mrb[0].mxu0
      %v1706 = vadd.f32 %v1351, %v1705
      %v1707 = vpop.f32.mrb[0].mxu0
      %1708 = vmatprep.mubr.f32.mxu0 0.0
      %1709 = vmatmul.mubr.f32.gmra.mrb[0].mxu0 %v1399
      %v1710 = vpop.f32.mrb[0].mxu0
      %v1711 = vadd.f32 %v1351, %v1710
      %v1712 = vpop.f32.mrb[0].mxu0
      %1713 = vmatprep.mubr.f32.mxu0 0.0
      %1714 = vmatmul.mubr.f32.gmra.mrb[0].mxu0 %v1402
      %v1715 = vpop.f32.mrb[0].mxu0
      %v1716 = vadd.f32 %v1351, %v1715
      %v1717 = vpop.f32.mrb[0].mxu0
      %1718 = vmatprep.mubr.f32.mxu0 0.0
      %1719 = vmatmul.mubr.f32.gmra.mrb[0].mxu0 %v1405
      %v1720 = vpop.f32.mrb[0].mxu0
      %v1721 = vadd.f32 %v1351, %v1720
      %v1722 = vpop.f32.mrb[0].mxu0
      %1723 = vmatprep.mubr.f32.mxu0 0.0
      %1724 = vmatmul.mubr.f32.gmra.mrb[0].mxu0 %v1408
      %v1725 = vpop.f32.mrb[0].mxu0
      %v1726 = vadd.f32 %v1351, %v1725
      %v1727 = vpop.f32.mrb[0].mxu0
      %1728 = vmatprep.mubr.f32.mxu0 0.0
      %1729 = vmatmul.mubr.f32.gmra.mrb[0].mxu0 %v1411
      %v1730 = vpop.f32.mrb[0].mxu0
      %v1731 = vadd.f32 %v1351, %v1730
      %v1732 = vpop.f32.mrb[0].mxu0
      %1733 = vmatprep.mubr.f32.mxu0 0.0
      %1734 = vmatmul.mubr.f32.gmra.mrb[0].mxu0 %v1414
      %v1735 = vpop.f32.mrb[0].mxu0
      %v1736 = vadd.f32 %v1351, %v1735
      %v1737 = vpop.f32.mrb[0].mxu0
      %1738 = vmatprep.mubr.f32.mxu0 0.0
      %1739 = vmatmul.mubr.f32.gmra.mrb[0].mxu0 %v1417
      %v1740 = vpop.f32.mrb[0].mxu0
      %v1741 = vadd.f32 %v1351, %v1740
      %v1742 = vpop.f32.mrb[0].mxu0
      %1743 = vmatprep.mubr.f32.mxu0 0.0
      %1744 = vmatmul.mubr.f32.gmra.mrb[0].mxu0 %v1420
      %v1745 = vpop.f32.mrb[0].mxu0
      %v1746 = vadd.f32 %v1351, %v1745
      %v1747 = vpop.f32.mrb[0].mxu0
      %1748 = vmatprep.mubr.f32.mxu0 0.0
      %1749 = vmatmul.mubr.f32.gmra.mrb[0].mxu0 %v1423
      %v1750 = vpop.f32.mrb[0].mxu0
      %v1751 = vadd.f32 %v1351, %v1750
      %v1752 = vpop.f32.mrb[0].mxu0
      %1753 = vmatprep.mubr.f32.mxu0 0.0
      %1754 = vmatmul.mubr.f32.gmra.mrb[0].mxu0 %v1426
      %v1755 = vpop.f32.mrb[0].mxu0
      %v1756 = vadd.f32 %v1351, %v1755
      %v1757 = vpop.f32.mrb[0].mxu0
      %1758 = vmatprep.mubr.f32.mxu0 0.0
      %1759 = vmatmul.mubr.f32.gmra.mrb[0].mxu0 %v1429
      %v1760 = vpop.f32.mrb[0].mxu0
      %v1761 = vadd.f32 %v1351, %v1760
      %v1762 = vpop.f32.mrb[0].mxu0
      %1763 = vmatprep.mubr.f32.mxu0 0.0
      %1764 = vmatmul.mubr.f32.gmra.mrb[0].mxu0 %v1432
      %v1765 = vpop.f32.mrb[0].mxu0
      %v1766 = vadd.f32 %v1351, %v1765
      %v1767 = vpop.f32.mrb[0].mxu0
      %1768 = vmatprep.mubr.f32.mxu0 0.0
      %1769 = vmatmul.mubr.f32.gmra.mrb[0].mxu0 %v1435
      %v1770 = vpop.f32.mrb[0].mxu0
      %v1771 = vadd.f32 %v1351, %v1770
      %v1772 = vpop.f32.mrb[0].mxu0
      %1773 = vmatprep.mubr.f32.mxu0 0.0
      %1774 = vmatmul.mubr.f32.gmra.mrb[0].mxu0 %v1438
      %v1775 = vpop.f32.mrb[0].mxu0
      %v1776 = vadd.f32 %v1351, %v1775
      %v1777 = vpop.f32.mrb[0].mxu0
      %1778 = vmatprep.mubr.f32.mxu0 0.0
      %1779 = vmatmul.mubr.f32.gmra.mrb[0].mxu0 %v1441
      %v1780 = vpop.f32.mrb[0].mxu0
      %v1781 = vadd.f32 %v1351, %v1780
      %v1782 = vpop.f32.mrb[0].mxu0
      %1783 = vmatprep.mubr.f32.mxu0 0.0
      %1784 = vmatmul.mubr.f32.gmra.mrb[0].mxu0 %v1444
      %v1785 = vpop.f32.mrb[0].mxu0
      %v1786 = vadd.f32 %v1351, %v1785
      %v1787 = vpop.f32.mrb[0].mxu0
      %1788 = vmatprep.mubr.f32.mxu0 0.0
      %1789 = vmatmul.mubr.f32.gmra.mrb[0].mxu0 %v1447
      %v1790 = vpop.f32.mrb[0].mxu0
      %v1791 = vadd.f32 %v1351, %v1790
      %v1792 = vpop.f32.mrb[0].mxu0
      %1793 = vmatprep.mubr.f32.mxu0 0.0
      %1794 = vmatmul.mubr.f32.gmra.mrb[0].mxu0 %v1450
      %v1795 = vpop.f32.mrb[0].mxu0
      %v1796 = vadd.f32 %v1351, %v1795
      %v1797 = vpop.f32.mrb[0].mxu0
      %1798 = vmatprep.mubr.f32.mxu0 0.0
      %1799 = vmatmul.mubr.f32.gmra.mrb[0].mxu0 %v1453
      %v1800 = vpop.f32.mrb[0].mxu0
      %v1801 = vadd.f32 %v1351, %v1800
      %v1802 = vpop.f32.mrb[0].mxu0
      %1803 = vmatprep.mubr.f32.mxu0 0.0
      %1804 = vmatmul.mubr.f32.gmra.mrb[0].mxu0 %v1456
      %v1805 = vpop.f32.mrb[0].mxu0
      %v1806 = vadd.f32 %v1351, %v1805
      %v1807 = vpop.f32.mrb[0].mxu0
      %1808 = vmatprep.mubr.f32.mxu0 0.0
      %1809 = vmatmul.mubr.f32.gmra.mrb[0].mxu0 %v1459
      %v1810 = vpop.f32.mrb[0].mxu0
      %v1811 = vadd.f32 %v1351, %v1810
      %v1812 = vpop.f32.mrb[0].mxu0
      %1813 = vmatprep.mubr.f32.mxu0 0.0
      %1814 = vmatmul.mubr.f32.gmra.mrb[0].mxu0 %v1462
      %v1815 = vpop.f32.mrb[0].mxu0
      %v1816 = vadd.f32 %v1351, %v1815
      %v1817 = vpop.f32.mrb[0].mxu0
      %1818 = vmatprep.mubr.f32.mxu0 0.0
      %1819 = vmatmul.mubr.f32.gmra.mrb[0].mxu0 %v1465
      %v1820 = vpop.f32.mrb[0].mxu0
      %v1821 = vadd.f32 %v1351, %v1820
      %v1822 = vpop.f32.mrb[0].mxu0
      %1823 = vmatprep.mubr.f32.mxu0 0.0
      %1824 = vmatmul.mubr.f32.gmra.mrb[0].mxu0 %v1468
      %v1825 = vpop.f32.mrb[0].mxu0
      %v1826 = vadd.f32 %v1351, %v1825
      %v1827 = vpop.f32.mrb[0].mxu0
      %1828 = vmatprep.mubr.f32.mxu0 0.0
      %1829 = vmatmul.mubr.f32.gmra.mrb[0].mxu0 %v1471
      %v1830 = vpop.f32.mrb[0].mxu0
      %v1831 = vadd.f32 %v1351, %v1830
      %v1832 = vpop.f32.mrb[0].mxu0
      %1833 = vmatprep.mubr.f32.mxu0 0.0
      %1834 = vmatmul.mubr.f32.gmra.mrb[0].mxu0 %v1474
      %v1835 = vpop.f32.mrb[0].mxu0
      %v1836 = vadd.f32 %v1351, %v1835
      %v1837 = vpop.f32.mrb[0].mxu0
      %1838 = vmatprep.mubr.f32.mxu0 0.0
      %1839 = vmatmul.mubr.f32.gmra.mrb[0].mxu0 %v1477
      %v1840 = vpop.f32.mrb[0].mxu0
      %v1841 = vadd.f32 %v1351, %v1840
      %v1842 = vpop.f32.mrb[0].mxu0
      %1843 = vmatprep.mubr.f32.mxu0 0.0
      %1844 = vmatmul.mubr.f32.gmra.mrb[0].mxu0 %v1480
      %v1845 = vpop.f32.mrb[0].mxu0
      %v1846 = vadd.f32 %v1351, %v1845
      %v1847 = vpop.f32.mrb[0].mxu0
      %1848 = vmatprep.mubr.f32.mxu0 0.0
      %1849 = vmatmul.mubr.f32.gmra.mrb[0].mxu0 %v1483
      %v1850 = vpop.f32.mrb[0].mxu0
      %v1851 = vadd.f32 %v1351, %v1850
      %v1852 = vpop.f32.mrb[0].mxu0
      %1853 = vmatprep.mubr.f32.mxu0 0.0
      %1854 = vmatmul.mubr.f32.gmra.mrb[0].mxu0 %v1486
      %v1855 = vpop.f32.mrb[0].mxu0
      %v1856 = vadd.f32 %v1351, %v1855
      %v1857 = vpop.f32.mrb[0].mxu0
      %1858 = vmatprep.mubr.f32.mxu0 0.0
      %1859 = vmatmul.mubr.f32.gmra.mrb[0].mxu0 %v1489
      %v1860 = vpop.f32.mrb[0].mxu0
      %v1861 = vadd.f32 %v1351, %v1860
      %v1862 = vpop.f32.mrb[0].mxu0
      %1863 = vmatprep.mubr.f32.mxu0 0.0
      %1864 = vmatmul.mubr.f32.gmra.mrb[0].mxu0 %v1492
      %v1865 = vpop.f32.mrb[0].mxu0
      %v1866 = vadd.f32 %v1351, %v1865
      %v1867 = vpop.f32.mrb[0].mxu0
      %1868 = vmatprep.mubr.f32.mxu0 0.0
      %1869 = vmatmul.mubr.f32.gmra.mrb[0].mxu0 %v1495
      %v1870 = vpop.f32.mrb[0].mxu0
      %v1871 = vadd.f32 %v1351, %v1870
      %v1872 = vpop.f32.mrb[0].mxu0
      %1873 = vmatprep.mubr.f32.mxu0 0.0
      %1874 = vmatmul.mubr.f32.gmra.mrb[0].mxu0 %v1498
      %v1875 = vpop.f32.mrb[0].mxu0
      %v1876 = vadd.f32 %v1351, %v1875
      %v1877 = vpop.f32.mrb[0].mxu0
      %1878 = vmatprep.mubr.f32.mxu0 0.0
      %1879 = vmatmul.mubr.f32.gmra.mrb[0].mxu0 %v1501
      %v1880 = vpop.f32.mrb[0].mxu0
      %v1881 = vadd.f32 %v1351, %v1880
      %v1882 = vpop.f32.mrb[0].mxu0
      %1883 = vmatprep.mubr.f32.mxu0 0.0
      %1884 = vmatmul.mubr.f32.gmra.mrb[0].mxu0 %v1504
      %v1885 = vpop.f32.mrb[0].mxu0
      %v1886 = vadd.f32 %v1351, %v1885
      %v1887 = vpop.f32.mrb[0].mxu0
      %1888 = vmatprep.mubr.f32.mxu0 0.0
      %1889 = vmatmul.mubr.f32.gmra.mrb[0].mxu0 %v1507
      %v1890 = vpop.f32.mrb[0].mxu0
      %v1891 = vadd.f32 %v1351, %v1890
      %v1892 = vpop.f32.mrb[0].mxu0
      %1893 = vmatprep.mubr.f32.mxu0 0.0
      %1894 = vmatmul.mubr.f32.gmra.mrb[0].mxu0 %v1510
      %v1895 = vpop.f32.mrb[0].mxu0
      %v1896 = vadd.f32 %v1351, %v1895
      %v1897 = vpop.f32.mrb[0].mxu0
      %1898 = vmatprep.mubr.f32.mxu0 0.0
      %1899 = vmatmul.mubr.f32.gmra.mrb[0].mxu0 %v1513
      %v1900 = vpop.f32.mrb[0].mxu0
      %v1901 = vadd.f32 %v1351, %v1900
      %v1902 = vpop.f32.mrb[0].mxu0
      %1903 = vmatprep.mubr.f32.mxu0 0.0
      %1904 = vmatmul.mubr.f32.gmra.mrb[0].mxu0 %v1516
      %v1905 = vpop.f32.mrb[0].mxu0
      %v1906 = vadd.f32 %v1351, %v1905
      %v1907 = vpop.f32.mrb[0].mxu0
      %1908 = vmatprep.mubr.f32.mxu0 0.0
      %1909 = vmatmul.mubr.f32.gmra.mrb[0].mxu0 %v1519
      %v1910 = vpop.f32.mrb[0].mxu0
      %v1911 = vadd.f32 %v1351, %v1910
      %v1912 = vpop.f32.mrb[0].mxu0
      %1913 = vmatprep.mubr.f32.mxu0 0.0
      %1914 = vmatmul.mubr.f32.gmra.mrb[0].mxu0 %v1522
      %v1915 = vpop.f32.mrb[0].mxu0
      %v1916 = vadd.f32 %v1351, %v1915
      %v1917 = vpop.f32.mrb[0].mxu0
      %1918 = vmatprep.mubr.f32.mxu0 0.0
      %1919 = vmatmul.mubr.f32.gmra.mrb[0].mxu0 %v1525
      %v1920 = vpop.f32.mrb[0].mxu0
      %v1921 = vadd.f32 %v1351, %v1920
      %v1922 = vpop.f32.mrb[0].mxu0
      %1923 = vmatprep.mubr.f32.mxu0 0.0
      %1924 = vmatmul.mubr.f32.gmra.mrb[0].mxu0 %v1528
      %v1925 = vpop.f32.mrb[0].mxu0
      %v1926 = vadd.f32 %v1351, %v1925
      %v1927 = vpop.f32.mrb[0].mxu0
      %1928 = vmatprep.mubr.f32.mxu0 0.0
      %1929 = vmatmul.mubr.f32.gmra.mrb[0].mxu0 %v1531
      %v1930 = vpop.f32.mrb[0].mxu0
      %v1931 = vadd.f32 %v1351, %v1930
      %v1932 = vpop.f32.mrb[0].mxu0
      %1933 = vmatprep.mubr.f32.mxu0 0.0
      %1934 = vmatmul.mubr.f32.gmra.mrb[0].mxu0 %v1534
      %v1935 = vpop.f32.mrb[0].mxu0
      %v1936 = vadd.f32 %v1351, %v1935
      %v1937 = vpop.f32.mrb[0].mxu0
      %1938 = vmatprep.mubr.f32.mxu0 0.0
      %1939 = vmatmul.mubr.f32.gmra.mrb[0].mxu0 %v1537
      %v1940 = vpop.f32.mrb[0].mxu0
      %v1941 = vadd.f32 %v1351, %v1940
      %v1942 = vpop.f32.mrb[0].mxu0
      %1943 = vmatprep.mubr.f32.mxu0 0.0
      %1944 = vmatmul.mubr.f32.gmra.mrb[0].mxu0 %v1540
      %v1945 = vpop.f32.mrb[0].mxu0
      %v1946 = vadd.f32 %v1351, %v1945
      %v1947 = vpop.f32.mrb[0].mxu0
      %1948 = vmatprep.mubr.f32.mxu0 0.0
      %1949 = vmatmul.mubr.f32.gmra.mrb[0].mxu0 %v1543
      %v1950 = vpop.f32.mrb[0].mxu0
      %v1951 = vadd.f32 %v1351, %v1950
      %v1952 = vpop.f32.mrb[0].mxu0
      %1953 = vdwg.mxu0
      %vm1954 = vcmask 523264
      %1955 = vst.msk [vmem:[%s296] sm:$0xff] %vm1954, %v1636
      %1956 = vst.msk [vmem:[%s296 + $0x8] sm:$0xff] %vm1954, %v1641
      %1957 = vst.msk [vmem:[%s296 + $0x10] sm:$0xff] %vm1954, %v1646
      %1958 = vst.msk [vmem:[%s296 + $0x18] sm:$0xff] %vm1954, %v1651
      %1959 = vst.msk [vmem:[%s296 + $0x20] sm:$0xff] %vm1954, %v1656
      %1960 = vst.msk [vmem:[%s296 + $0x28] sm:$0xff] %vm1954, %v1661
      %1961 = vst.msk [vmem:[%s296 + $0x30] sm:$0xff] %vm1954, %v1666
      %1962 = vst.msk [vmem:[%s296 + $0x38] sm:$0xff] %vm1954, %v1671
      %1963 = vst.msk [vmem:[%s296 + $0x40] sm:$0xff] %vm1954, %v1676
      %1964 = vst.msk [vmem:[%s296 + $0x48] sm:$0xff] %vm1954, %v1681
      %1965 = vst.msk [vmem:[%s296 + $0x50] sm:$0xff] %vm1954, %v1686
      %1966 = vst.msk [vmem:[%s296 + $0x58] sm:$0xff] %vm1954, %v1691
      %1967 = vst.msk [vmem:[%s296 + $0x60] sm:$0xff] %vm1954, %v1696
      %1968 = vst.msk [vmem:[%s296 + $0x68] sm:$0xff] %vm1954, %v1701
      %1969 = vst.msk [vmem:[%s296 + $0x70] sm:$0xff] %vm1954, %v1706
      %1970 = vst.msk [vmem:[%s296 + $0x78] sm:$0xff] %vm1954, %v1711
      %1971 = vst.msk [vmem:[%s296 + $0x80] sm:$0xff] %vm1954, %v1716
      %1972 = vst.msk [vmem:[%s296 + $0x88] sm:$0xff] %vm1954, %v1721
      %1973 = vst.msk [vmem:[%s296 + $0x90] sm:$0xff] %vm1954, %v1726
      %1974 = vst.msk [vmem:[%s296 + $0x98] sm:$0xff] %vm1954, %v1731
      %1975 = vst.msk [vmem:[%s296 + $0xa0] sm:$0xff] %vm1954, %v1736
      %1976 = vst.msk [vmem:[%s296 + $0xa8] sm:$0xff] %vm1954, %v1741
      %1977 = vst.msk [vmem:[%s296 + $0xb0] sm:$0xff] %vm1954, %v1746
      %1978 = vst.msk [vmem:[%s296 + $0xb8] sm:$0xff] %vm1954, %v1751
      %1979 = vst.msk [vmem:[%s296 + $0xc0] sm:$0xff] %vm1954, %v1756
      %1980 = vst.msk [vmem:[%s296 + $0xc8] sm:$0xff] %vm1954, %v1761
      %1981 = vst.msk [vmem:[%s296 + $0xd0] sm:$0xff] %vm1954, %v1766
      %1982 = vst.msk [vmem:[%s296 + $0xd8] sm:$0xff] %vm1954, %v1771
      %1983 = vst.msk [vmem:[%s296 + $0xe0] sm:$0xff] %vm1954, %v1776
      %1984 = vst.msk [vmem:[%s296 + $0xe8] sm:$0xff] %vm1954, %v1781
      %1985 = vst.msk [vmem:[%s296 + $0xf0] sm:$0xff] %vm1954, %v1786
      %1986 = vst.msk [vmem:[%s296 + $0xf8] sm:$0xff] %vm1954, %v1791
      %1987 = vst.msk [vmem:[%s296 + $0x100] sm:$0xff] %vm1954, %v1796
      %1988 = vst.msk [vmem:[%s296 + $0x108] sm:$0xff] %vm1954, %v1801
      %1989 = vst.msk [vmem:[%s296 + $0x110] sm:$0xff] %vm1954, %v1806
      %1990 = vst.msk [vmem:[%s296 + $0x118] sm:$0xff] %vm1954, %v1811
      %1991 = vst.msk [vmem:[%s296 + $0x120] sm:$0xff] %vm1954, %v1816
      %1992 = vst.msk [vmem:[%s296 + $0x128] sm:$0xff] %vm1954, %v1821
      %1993 = vst.msk [vmem:[%s296 + $0x130] sm:$0xff] %vm1954, %v1826
      %1994 = vst.msk [vmem:[%s296 + $0x138] sm:$0xff] %vm1954, %v1831
      %1995 = vst.msk [vmem:[%s296 + $0x140] sm:$0xff] %vm1954, %v1836
      %1996 = vst.msk [vmem:[%s296 + $0x148] sm:$0xff] %vm1954, %v1841
      %1997 = vst.msk [vmem:[%s296 + $0x150] sm:$0xff] %vm1954, %v1846
      %1998 = vst.msk [vmem:[%s296 + $0x158] sm:$0xff] %vm1954, %v1851
      %1999 = vst.msk [vmem:[%s296 + $0x160] sm:$0xff] %vm1954, %v1856
      %2000 = vst.msk [vmem:[%s296 + $0x168] sm:$0xff] %vm1954, %v1861
      %2001 = vst.msk [vmem:[%s296 + $0x170] sm:$0xff] %vm1954, %v1866
      %2002 = vst.msk [vmem:[%s296 + $0x178] sm:$0xff] %vm1954, %v1871
      %2003 = vst.msk [vmem:[%s296 + $0x180] sm:$0xff] %vm1954, %v1876
      %2004 = vst.msk [vmem:[%s296 + $0x188] sm:$0xff] %vm1954, %v1881
      %2005 = vst.msk [vmem:[%s296 + $0x190] sm:$0xff] %vm1954, %v1886
      %2006 = vst.msk [vmem:[%s296 + $0x198] sm:$0xff] %vm1954, %v1891
      %2007 = vst.msk [vmem:[%s296 + $0x1a0] sm:$0xff] %vm1954, %v1896
      %2008 = vst.msk [vmem:[%s296 + $0x1a8] sm:$0xff] %vm1954, %v1901
      %2009 = vst.msk [vmem:[%s296 + $0x1b0] sm:$0xff] %vm1954, %v1906
      %2010 = vst.msk [vmem:[%s296 + $0x1b8] sm:$0xff] %vm1954, %v1911
      %2011 = vst.msk [vmem:[%s296 + $0x1c0] sm:$0xff] %vm1954, %v1916
      %2012 = vst.msk [vmem:[%s296 + $0x1c8] sm:$0xff] %vm1954, %v1921
      %2013 = vst.msk [vmem:[%s296 + $0x1d0] sm:$0xff] %vm1954, %v1926
      %2014 = vst.msk [vmem:[%s296 + $0x1d8] sm:$0xff] %vm1954, %v1931
      %2015 = vst.msk [vmem:[%s296 + $0x1e0] sm:$0xff] %vm1954, %v1936
      %2016 = vst.msk [vmem:[%s296 + $0x1e8] sm:$0xff] %vm1954, %v1941
      %2017 = vst.msk [vmem:[%s296 + $0x1f0] sm:$0xff] %vm1954, %v1946
      %2018 = vst.msk [vmem:[%s296 + $0x1f8] sm:$0xff] %vm1954, %v1951
      %s2019 = smul.u32 64, %s21
      %p2020 = scmp.lt.s32.totalorder %s20, 1
      %s2021 = scalar_select %p2020, %s20, 1
      %p2022 = scmp.lt.s32.totalorder %s2019, 63
      %s2023 = scalar_select %p2022, %s2019, 63
      %s2024 = smul.addr %s2021, 64
      %s2025 = sadd.s32 %s2023, %s2024
      %s2026 = smul.addr %s2025, 8
      %s2027 = scalar_lea.vmem %s5, %s2026
      // Predicated region
      $region41: #{tpu_custom_call.1} parent=39 // pred_check
        %p2028 = pneg %p170
      $region42: #{tpu_custom_call.1} parent=39 // pred_check_branch
        %2030 = sbr.rel (%p2028) target = $region44
      $region43: #{tpu_custom_call.1} parent=39 // pred_region
        %s2031 = smul.u32 64, %s21
      $region44: #{tpu_custom_call.1} parent=39 // pred_fallthru
        _
    $region40: #{tpu_custom_call.1} parent=5 // pred_fallthru
      _
    %p2032 = scmp.le.s32.totalorder 2, %s11
    // Predicated region
    $region45: #{tpu_custom_call.1} parent=5 // pred_check
      %p2033 = pneg %p2032
    $region46: #{tpu_custom_call.1} parent=5 // pred_check_branch
      %2035 = sbr.rel (%p2033) target = $region48
    $region47: #{tpu_custom_call.1} parent=5 // pred_region
      %s2036 = ssub.s32 %s11, 2
      // Predicated region
      $region49: #{tpu_custom_call.1} parent=47 // pred_check
        %p2037 = pneg %p176
      $region50: #{tpu_custom_call.1} parent=47 // pred_check_branch
        %2039 = sbr.rel (%p2037) target = $region52
      $region51: #{tpu_custom_call.1} parent=47 // pred_region
        %s2040 = smul.u32 64, %s23
        %p2041 = scmp.lt.s32.totalorder %s22, 1
        %s2042 = scalar_select %p2041, %s22, 1
        %p2043 = scmp.lt.s32.totalorder %s2040, 63
        %s2044 = scalar_select %p2043, %s2040, 63
        %s2045 = smul.addr %s2042, 64
        %s2046 = sadd.s32 %s2044, %s2045
        %s2047 = smul.addr %s2046, 8
        %s2048 = scalar_lea.vmem %s5, %s2047
      $region52: #{tpu_custom_call.1} parent=47 // pred_fallthru
        _
    $region48: #{tpu_custom_call.1} parent=5 // pred_fallthru
      _
  $region6: #{tpu_custom_call.1} parent=0 // loop_footer
    %s15 = sadd.s32 1, %s11
  $region7: #{tpu_custom_call.1} parent=0 // loop_footer_branch
    %10 = sbr.rel target = $region3
  $region8: #{tpu_custom_call.1} parent=0 // loop_exit
    _

</llo_original>
